<compile_context>
chip_gen: v7x
topology: tpu7x:2x2x1
jax: 0.10.0
libtpu: 0.0.40
codegen_flags: <defaults>
</compile_context>

<pallas_src>
import functools

import jax
import jax.numpy as jnp
from jax.experimental import pallas as pl
from jax.experimental.pallas import tpu as pltpu


def _basic_block_kernel(x_ref, w1_ref, w2_ref, s1_ref, b1_ref, s2_ref, b2_ref,
                        o_ref, *, img_rows):
    """Fused BasicBlock forward for one slab of B_TILE images.

    x_ref:   (M, WC)       lane-fused input rows, M = B_TILE * H
    w*_ref:  (3, WC, WC)   banded block weights, one (WC, WC) slice per dy tap
    s*/b*:   (1, WC)       folded BN scale / bias, pre-tiled to lane width
    o_ref:   (M, WC)       lane-fused output rows
    """
    M, WC = x_ref.shape
    H = img_rows
    xf = x_ref[...].astype(jnp.float32)                       # lane-dense load

    # Local (within-image) row index of every output row.  Rows whose h-1/h+1
    # neighbour falls in the SAME-conv zero padding get masked; this also
    # kills the wrap-around row introduced by the roll and keeps the B_TILE
    # images inside one slab independent of each other.
    row = jax.lax.broadcasted_iota(jnp.int32, (M, WC), 0)
    if H & (H - 1) == 0:                                       # H power of two
        local = row & (H - 1)
    else:
        local = jax.lax.rem(row, H)
    has_up = local != 0            # row h-1 exists inside the image
    has_dn = local != H - 1        # row h+1 exists inside the image

    def conv_bn(inp, w_ref, s_ref, b_ref):
        cdt = w_ref.dtype                                      # MXU operand dtype
        # Shifted row slabs via sublane rotation (XLU) + boundary masking (VPU).
        up = jnp.where(has_up, pltpu.roll(inp, 1, axis=0), 0.0)      # row h-1
        dn = jnp.where(has_dn, pltpu.roll(inp, M - 1, axis=0), 0.0)  # row h+1
        # Three accumulated lane-dense MXU dots (K = 3 x WC split).
        acc = jnp.dot(up.astype(cdt), w_ref[0],
                      preferred_element_type=jnp.float32)
        acc += jnp.dot(inp.astype(cdt), w_ref[1],
                       preferred_element_type=jnp.float32)
        acc += jnp.dot(dn.astype(cdt), w_ref[2],
                       preferred_element_type=jnp.float32)
        return acc * s_ref[...] + b_ref[...]                   # folded BN, f32

    h1 = jnp.maximum(conv_bn(xf, w1_ref, s1_ref, b1_ref), 0.0)   # conv1+bn1+relu1
    out = conv_bn(h1, w2_ref, s2_ref, b2_ref)                    # conv2+bn2
    out = jnp.maximum(out + xf, 0.0)                             # +identity, relu2
    o_ref[...] = out.astype(o_ref.dtype)


def _fold_bn(gamma, beta, mean, var, eps=1e-3):
    # BatchNorm2d(eps=0.001) inference: y = (x - mean) * gamma/sqrt(var+eps) + beta
    scale = gamma * jax.lax.rsqrt(var + eps)
    bias = beta - mean * scale
    return scale, bias


def _band_weights(w_hwio, W, dtype):
    """(3, 3, Ci, Co) conv weights -> (3, W*Ci, W*Co) banded block matrices.

    band[dy, u*Ci + ci, w*Co + co] = w[dy, u-w+1, ci, co] when 0 <= u-w+1 < 3,
    else 0.  Folds the three horizontal taps AND the horizontal zero padding
    of a SAME 3x3 conv into the K dimension of three lane-dense matmuls.
    Intended for small channel counts (here W*Ci == 128); for large Ci use
    im2col with K = 9*Ci instead (NHWC is then already lane-dense).
    """
    KH, KW, Ci, Co = w_hwio.shape
    u = jnp.arange(W)[:, None]          # input column
    w_out = jnp.arange(W)[None, :]      # output column
    dx = u - w_out + 1                  # horizontal tap index
    valid = (dx >= 0) & (dx < KW)
    big = w_hwio[:, jnp.clip(dx, 0, KW - 1)]                 # (KH, W, W, Ci, Co)
    big = jnp.where(valid[None, :, :, None, None], big, 0.0)
    big = jnp.transpose(big, (0, 1, 3, 2, 4))                 # (dy, u, ci, w, co)
    return big.reshape(KH, W * Ci, W * Co).astype(dtype)


def _pick_b_tile(n_imgs, img_rows):
    """Images per grid step: target M = b_tile*H up to ~256 rows (fills the
    v6e/v7x MXU), but keep >= 2 grid steps whenever possible so v7x's two
    TensorCores both get work (the grid axis is 'parallel')."""
    max_tile = max(1, 256 // max(1, img_rows))
    best = 1
    for bt in range(1, min(n_imgs, max_tile) + 1):
        if n_imgs % bt == 0 and (n_imgs // bt >= 2 or n_imgs == 1):
            best = bt
    return best


def basic_block_forward(x_nchw, params, *, matmul_dtype=jnp.bfloat16, b_tile=None):
    """BasicBlock.forward (stride=1, padding=1, downsample=False). NCHW in/out."""
    N, Cin, H, W = x_nchw.shape
    C = params["w1"].shape[-1]
    assert Cin == C, "identity skip requires inplanes == planes"
    WC = W * C
    assert WC % 128 == 0, "lane-fused layout wants W*C to be a multiple of 128"
    # TODO(synk): stride>1 / downsample_layer (1x1 conv + BN) branch not implemented.

    if b_tile is None:
        b_tile = _pick_b_tile(N, H)
    assert N % b_tile == 0
    assert (b_tile * H) % 8 == 0, "row-slab must be sublane aligned"

    # NCHW -> NHWC -> lane-fused rows (N*H, W*C); free row-major merges.
    x = jnp.transpose(x_nchw, (0, 2, 3, 1)).reshape(N * H, WC)

    s1, b1 = _fold_bn(params["gamma1"], params["beta1"],
                      params["mean1"], params["var1"])
    s2, b2 = _fold_bn(params["gamma2"], params["beta2"],
                      params["mean2"], params["var2"])
    # Pre-tile BN scale/bias to the fused lane width -> single unmasked FMA.
    s1t = jnp.tile(s1, W).reshape(1, WC)
    b1t = jnp.tile(b1, W).reshape(1, WC)
    s2t = jnp.tile(s2, W).reshape(1, WC)
    b2t = jnp.tile(b2, W).reshape(1, WC)

    # Banded weights shipped in the MXU operand dtype (bf16 halves weight DMA).
    w1 = _band_weights(params["w1"], W, matmul_dtype)   # (3, W*Cin, W*C)
    w2 = _band_weights(params["w2"], W, matmul_dtype)   # (3, W*C,   W*C)

    kernel = functools.partial(_basic_block_kernel, img_rows=H)
    rows_per_step = b_tile * H

    out = pl.pallas_call(
        kernel,
        out_shape=jax.ShapeDtypeStruct((N * H, WC), x.dtype),
        grid=(N // b_tile,),
        in_specs=[
            pl.BlockSpec((rows_per_step, WC), lambda n: (n, 0)),
            pl.BlockSpec((3, WC, WC), lambda n: (0, 0, 0)),
            pl.BlockSpec((3, WC, WC), lambda n: (0, 0, 0)),
            pl.BlockSpec((1, WC), lambda n: (0, 0)),
            pl.BlockSpec((1, WC), lambda n: (0, 0)),
            pl.BlockSpec((1, WC), lambda n: (0, 0)),
            pl.BlockSpec((1, WC), lambda n: (0, 0)),
        ],
        out_specs=pl.BlockSpec((rows_per_step, WC), lambda n: (n, 0)),
        compiler_params=pltpu.CompilerParams(
            dimension_semantics=("parallel",)),
    )(x, w1, w2, s1t, b1t, s2t, b2t)

    return jnp.transpose(out.reshape(N, H, W, C), (0, 3, 1, 2))


def _reference_forward(x_nchw, params):
    """Pure-JAX reference (same math, full f32) for a sanity check."""
    x = jnp.transpose(x_nchw, (0, 2, 3, 1))

    def conv(inp, w):
        return jax.lax.conv_general_dilated(
            inp, w, window_strides=(1, 1), padding="SAME",
            dimension_numbers=("NHWC", "HWIO", "NHWC"),
            precision=jax.lax.Precision.HIGHEST)

    s1, b1 = _fold_bn(params["gamma1"], params["beta1"],
                      params["mean1"], params["var1"])
    s2, b2 = _fold_bn(params["gamma2"], params["beta2"],
                      params["mean2"], params["var2"])

    out = jnp.maximum(conv(x, params["w1"]) * s1 + b1, 0.0)
    out = conv(out, params["w2"]) * s2 + b2
    out = jnp.maximum(out + x, 0.0)
    return jnp.transpose(out, (0, 3, 1, 2))


def make_params(key, inplanes, planes):
    ks = jax.random.split(key, 8)
    return {
        # conv weights directly in HWIO (PyTorch keeps OIHW; math identical).
        "w1": 0.1 * jax.random.normal(ks[0], (3, 3, inplanes, planes), jnp.float32),
        "w2": 0.1 * jax.random.normal(ks[1], (3, 3, planes, planes), jnp.float32),
        "gamma1": 1.0 + 0.1 * jax.random.normal(ks[2], (planes,), jnp.float32),
        "beta1": 0.1 * jax.random.normal(ks[3], (planes,), jnp.float32),
        "mean1": 0.05 * jax.random.normal(ks[4], (planes,), jnp.float32),
        "var1": jnp.abs(jax.random.normal(ks[5], (planes,), jnp.float32)) + 0.5,
        "gamma2": 1.0 + 0.1 * jax.random.normal(ks[6], (planes,), jnp.float32),
        "beta2": 0.1 * jax.random.normal(ks[7], (planes,), jnp.float32),
        "mean2": jnp.zeros((planes,), jnp.float32),
        "var2": jnp.ones((planes,), jnp.float32),
    }


if __name__ == "__main__":
    # inplanes == planes == 8, stride=1, downsample=False; W*C = 128 (lane-dense).
    # N=8 with B_TILE=4 -> grid=(2,) 'parallel' (both v7x TCs), M = 64 rows/matmul.
    N, C, H, W = 8, 8, 16, 16
    key = jax.random.PRNGKey(0)
    kx, kp = jax.random.split(key)
    x = jax.random.normal(kx, (N, C, H, W), jnp.float32)
    params = make_params(kp, C, C)

    ref = jax.block_until_ready(_reference_forward(x, params))

    out = jax.block_until_ready(basic_block_forward(x, params))          # bf16 MXU path
    out_exact = jax.block_until_ready(
        basic_block_forward(x, params, matmul_dtype=jnp.float32))        # exact f32 path

    assert out.shape == (N, C, H, W)
    assert jnp.allclose(out_exact, ref, atol=1e-3, rtol=1e-3), "f32 path mismatch"
    assert jnp.allclose(out, ref, atol=2e-2, rtol=2e-2), "bf16 path mismatch"

    print("KERNEL_OK")
</pallas_src>

<mosaic_0001>
module attributes {stable_mosaic.version = 11 : i64} {
  func.func @_basic_block_kernel(%arg0: i32, %arg1: memref<64x128xf32, #tpu.memory_space<vmem>>, %arg2: memref<3x128x128xbf16, #tpu.memory_space<vmem>>, %arg3: memref<3x128x128xbf16, #tpu.memory_space<vmem>>, %arg4: memref<1x128xf32, #tpu.memory_space<vmem>>, %arg5: memref<1x128xf32, #tpu.memory_space<vmem>>, %arg6: memref<1x128xf32, #tpu.memory_space<vmem>>, %arg7: memref<1x128xf32, #tpu.memory_space<vmem>>, %arg8: memref<64x128xf32, #tpu.memory_space<vmem>>) attributes {dimension_semantics = [#tpu.dimension_semantics<parallel>], iteration_bounds = array<i64: 2>, scalar_prefetch = 0 : i64, scratch_operands = 0 : i64, tpu.core_type = #tpu.core_type<tc>, window_params = [{transform_indices = @transform_0, window_bounds = array<i64: 64, 128>}, {pipeline_mode = #tpu.pipeline_mode<synchronous>, transform_indices = @transform_1, window_bounds = array<i64: 3, 128, 128>}, {pipeline_mode = #tpu.pipeline_mode<synchronous>, transform_indices = @transform_2, window_bounds = array<i64: 3, 128, 128>}, {pipeline_mode = #tpu.pipeline_mode<synchronous>, transform_indices = @transform_3, window_bounds = array<i64: 1, 128>}, {pipeline_mode = #tpu.pipeline_mode<synchronous>, transform_indices = @transform_4, window_bounds = array<i64: 1, 128>}, {pipeline_mode = #tpu.pipeline_mode<synchronous>, transform_indices = @transform_5, window_bounds = array<i64: 1, 128>}, {pipeline_mode = #tpu.pipeline_mode<synchronous>, transform_indices = @transform_6, window_bounds = array<i64: 1, 128>}, {transform_indices = @transform_7, window_bounds = array<i64: 64, 128>}]} {
    %c0 = arith.constant 0 : index
    %c0_0 = arith.constant 0 : index
    %0 = vector.load %arg1[%c0, %c0_0] : memref<64x128xf32, #tpu.memory_space<vmem>>, vector<64x128xf32>
    %1 = tpu.iota {dimensions = array<i32: 0>} : vector<64x128xi32>
    %c15_i32 = arith.constant 15 : i32
    %2 = vector.broadcast %c15_i32 : i32 to vector<64x128xi32>
    %3 = arith.andi %1, %2 : vector<64x128xi32>
    %c0_i32 = arith.constant 0 : i32
    %4 = vector.broadcast %c0_i32 : i32 to vector<64x128xi32>
    %5 = arith.cmpi ne, %3, %4 : vector<64x128xi32>
    %c15_i32_1 = arith.constant 15 : i32
    %6 = vector.broadcast %c15_i32_1 : i32 to vector<64x128xi32>
    %7 = arith.cmpi ne, %3, %6 : vector<64x128xi32>
    %c1_i32 = arith.constant 1 : i32
    %8 = tpu.dynamic_rotate %0 by %c1_i32 dim 0 : vector<64x128xf32>, i32 -> vector<64x128xf32>
    %cst = arith.constant 0.000000e+00 : f32
    %9 = vector.broadcast %cst : f32 to vector<64x128xf32>
    %10 = arith.select %5, %8, %9 : vector<64x128xi1>, vector<64x128xf32>
    %c63_i32 = arith.constant 63 : i32
    %11 = tpu.dynamic_rotate %0 by %c63_i32 dim 0 : vector<64x128xf32>, i32 -> vector<64x128xf32>
    %cst_2 = arith.constant 0.000000e+00 : f32
    %12 = vector.broadcast %cst_2 : f32 to vector<64x128xf32>
    %13 = arith.select %7, %11, %12 : vector<64x128xi1>, vector<64x128xf32>
    %14 = arith.truncf %10 : vector<64x128xf32> to vector<64x128xbf16>
    %c0_3 = arith.constant 0 : index
    %c0_4 = arith.constant 0 : index
    %c0_5 = arith.constant 0 : index
    %15 = vector.load %arg2[%c0_3, %c0_4, %c0_5] : memref<3x128x128xbf16, #tpu.memory_space<vmem>>, vector<1x128x128xbf16>
    %16 = vector.shape_cast %15 : vector<1x128x128xbf16> to vector<128x128xbf16>
    %cst_6 = arith.constant dense<0.000000e+00> : vector<64x128xf32>
    %17 = tpu.matmul %14, %16, %cst_6 {dimension_numbers = #tpu.dot_dimension_numbers<[1], [0], [0], [1], [0, 0, 1, 1], [], []>} : vector<64x128xbf16>, vector<128x128xbf16>, vector<64x128xf32> -> vector<64x128xf32>
    %18 = arith.truncf %0 : vector<64x128xf32> to vector<64x128xbf16>
    %c1 = arith.constant 1 : index
    %c0_7 = arith.constant 0 : index
    %c0_8 = arith.constant 0 : index
    %19 = vector.load %arg2[%c1, %c0_7, %c0_8] : memref<3x128x128xbf16, #tpu.memory_space<vmem>>, vector<1x128x128xbf16>
    %20 = vector.shape_cast %19 : vector<1x128x128xbf16> to vector<128x128xbf16>
    %cst_9 = arith.constant dense<0.000000e+00> : vector<64x128xf32>
    %21 = tpu.matmul %18, %20, %cst_9 {dimension_numbers = #tpu.dot_dimension_numbers<[1], [0], [0], [1], [0, 0, 1, 1], [], []>} : vector<64x128xbf16>, vector<128x128xbf16>, vector<64x128xf32> -> vector<64x128xf32>
    %22 = arith.addf %17, %21 : vector<64x128xf32>
    %23 = arith.truncf %13 : vector<64x128xf32> to vector<64x128xbf16>
    %c2 = arith.constant 2 : index
    %c0_10 = arith.constant 0 : index
    %c0_11 = arith.constant 0 : index
    %24 = vector.load %arg2[%c2, %c0_10, %c0_11] : memref<3x128x128xbf16, #tpu.memory_space<vmem>>, vector<1x128x128xbf16>
    %25 = vector.shape_cast %24 : vector<1x128x128xbf16> to vector<128x128xbf16>
    %cst_12 = arith.constant dense<0.000000e+00> : vector<64x128xf32>
    %26 = tpu.matmul %23, %25, %cst_12 {dimension_numbers = #tpu.dot_dimension_numbers<[1], [0], [0], [1], [0, 0, 1, 1], [], []>} : vector<64x128xbf16>, vector<128x128xbf16>, vector<64x128xf32> -> vector<64x128xf32>
    %27 = arith.addf %22, %26 : vector<64x128xf32>
    %c0_13 = arith.constant 0 : index
    %c0_14 = arith.constant 0 : index
    %28 = vector.load %arg4[%c0_13, %c0_14] : memref<1x128xf32, #tpu.memory_space<vmem>>, vector<1x128xf32>
    %29 = vector.broadcast %28 : vector<1x128xf32> to vector<64x128xf32>
    %30 = arith.mulf %27, %29 : vector<64x128xf32>
    %c0_15 = arith.constant 0 : index
    %c0_16 = arith.constant 0 : index
    %31 = vector.load %arg5[%c0_15, %c0_16] : memref<1x128xf32, #tpu.memory_space<vmem>>, vector<1x128xf32>
    %32 = vector.broadcast %31 : vector<1x128xf32> to vector<64x128xf32>
    %33 = arith.addf %30, %32 : vector<64x128xf32>
    %cst_17 = arith.constant 0.000000e+00 : f32
    %34 = vector.broadcast %cst_17 : f32 to vector<64x128xf32>
    %35 = arith.maximumf %33, %34 : vector<64x128xf32>
    %c1_i32_18 = arith.constant 1 : i32
    %36 = tpu.dynamic_rotate %35 by %c1_i32_18 dim 0 : vector<64x128xf32>, i32 -> vector<64x128xf32>
    %cst_19 = arith.constant 0.000000e+00 : f32
    %37 = vector.broadcast %cst_19 : f32 to vector<64x128xf32>
    %38 = arith.select %5, %36, %37 : vector<64x128xi1>, vector<64x128xf32>
    %c63_i32_20 = arith.constant 63 : i32
    %39 = tpu.dynamic_rotate %35 by %c63_i32_20 dim 0 : vector<64x128xf32>, i32 -> vector<64x128xf32>
    %cst_21 = arith.constant 0.000000e+00 : f32
    %40 = vector.broadcast %cst_21 : f32 to vector<64x128xf32>
    %41 = arith.select %7, %39, %40 : vector<64x128xi1>, vector<64x128xf32>
    %42 = arith.truncf %38 : vector<64x128xf32> to vector<64x128xbf16>
    %c0_22 = arith.constant 0 : index
    %c0_23 = arith.constant 0 : index
    %c0_24 = arith.constant 0 : index
    %43 = vector.load %arg3[%c0_22, %c0_23, %c0_24] : memref<3x128x128xbf16, #tpu.memory_space<vmem>>, vector<1x128x128xbf16>
    %44 = vector.shape_cast %43 : vector<1x128x128xbf16> to vector<128x128xbf16>
    %cst_25 = arith.constant dense<0.000000e+00> : vector<64x128xf32>
    %45 = tpu.matmul %42, %44, %cst_25 {dimension_numbers = #tpu.dot_dimension_numbers<[1], [0], [0], [1], [0, 0, 1, 1], [], []>} : vector<64x128xbf16>, vector<128x128xbf16>, vector<64x128xf32> -> vector<64x128xf32>
    %46 = arith.truncf %35 : vector<64x128xf32> to vector<64x128xbf16>
    %c1_26 = arith.constant 1 : index
    %c0_27 = arith.constant 0 : index
    %c0_28 = arith.constant 0 : index
    %47 = vector.load %arg3[%c1_26, %c0_27, %c0_28] : memref<3x128x128xbf16, #tpu.memory_space<vmem>>, vector<1x128x128xbf16>
    %48 = vector.shape_cast %47 : vector<1x128x128xbf16> to vector<128x128xbf16>
    %cst_29 = arith.constant dense<0.000000e+00> : vector<64x128xf32>
    %49 = tpu.matmul %46, %48, %cst_29 {dimension_numbers = #tpu.dot_dimension_numbers<[1], [0], [0], [1], [0, 0, 1, 1], [], []>} : vector<64x128xbf16>, vector<128x128xbf16>, vector<64x128xf32> -> vector<64x128xf32>
    %50 = arith.addf %45, %49 : vector<64x128xf32>
    %51 = arith.truncf %41 : vector<64x128xf32> to vector<64x128xbf16>
    %c2_30 = arith.constant 2 : index
    %c0_31 = arith.constant 0 : index
    %c0_32 = arith.constant 0 : index
    %52 = vector.load %arg3[%c2_30, %c0_31, %c0_32] : memref<3x128x128xbf16, #tpu.memory_space<vmem>>, vector<1x128x128xbf16>
    %53 = vector.shape_cast %52 : vector<1x128x128xbf16> to vector<128x128xbf16>
    %cst_33 = arith.constant dense<0.000000e+00> : vector<64x128xf32>
    %54 = tpu.matmul %51, %53, %cst_33 {dimension_numbers = #tpu.dot_dimension_numbers<[1], [0], [0], [1], [0, 0, 1, 1], [], []>} : vector<64x128xbf16>, vector<128x128xbf16>, vector<64x128xf32> -> vector<64x128xf32>
    %55 = arith.addf %50, %54 : vector<64x128xf32>
    %c0_34 = arith.constant 0 : index
    %c0_35 = arith.constant 0 : index
    %56 = vector.load %arg6[%c0_34, %c0_35] : memref<1x128xf32, #tpu.memory_space<vmem>>, vector<1x128xf32>
    %57 = vector.broadcast %56 : vector<1x128xf32> to vector<64x128xf32>
    %58 = arith.mulf %55, %57 : vector<64x128xf32>
    %c0_36 = arith.constant 0 : index
    %c0_37 = arith.constant 0 : index
    %59 = vector.load %arg7[%c0_36, %c0_37] : memref<1x128xf32, #tpu.memory_space<vmem>>, vector<1x128xf32>
    %60 = vector.broadcast %59 : vector<1x128xf32> to vector<64x128xf32>
    %61 = arith.addf %58, %60 : vector<64x128xf32>
    %62 = arith.addf %61, %0 : vector<64x128xf32>
    %cst_38 = arith.constant 0.000000e+00 : f32
    %63 = vector.broadcast %cst_38 : f32 to vector<64x128xf32>
    %64 = arith.maximumf %62, %63 : vector<64x128xf32>
    %c0_39 = arith.constant 0 : index
    %c0_40 = arith.constant 0 : index
    %65 = vector.load %arg8[%c0_39, %c0_40] : memref<64x128xf32, #tpu.memory_space<vmem>>, vector<64x128xf32>
    tpu.vector_store %arg8[%c0_39, %c0_40], %64 {strides = array<i32>} : memref<64x128xf32, #tpu.memory_space<vmem>>, vector<64x128xf32>,
    return
  }
  func.func @transform_0(%arg0: i32) -> (i32, i32) {
    %c0_i32 = arith.constant 0 : i32
    %c0_i32_0 = arith.constant 0 : i32
    return %arg0, %c0_i32 : i32, i32
  }
  func.func @transform_1(%arg0: i32) -> (i32, i32, i32) {
    %c0_i32 = arith.constant 0 : i32
    %c0_i32_0 = arith.constant 0 : i32
    %c0_i32_1 = arith.constant 0 : i32
    %c0_i32_2 = arith.constant 0 : i32
    return %c0_i32, %c0_i32_0, %c0_i32_1 : i32, i32, i32
  }
  func.func @transform_2(%arg0: i32) -> (i32, i32, i32) {
    %c0_i32 = arith.constant 0 : i32
    %c0_i32_0 = arith.constant 0 : i32
    %c0_i32_1 = arith.constant 0 : i32
    %c0_i32_2 = arith.constant 0 : i32
    return %c0_i32, %c0_i32_0, %c0_i32_1 : i32, i32, i32
  }
  func.func @transform_3(%arg0: i32) -> (i32, i32) {
    %c0_i32 = arith.constant 0 : i32
    %c0_i32_0 = arith.constant 0 : i32
    %c0_i32_1 = arith.constant 0 : i32
    return %c0_i32, %c0_i32_0 : i32, i32
  }
  func.func @transform_4(%arg0: i32) -> (i32, i32) {
    %c0_i32 = arith.constant 0 : i32
    %c0_i32_0 = arith.constant 0 : i32
    %c0_i32_1 = arith.constant 0 : i32
    return %c0_i32, %c0_i32_0 : i32, i32
  }
  func.func @transform_5(%arg0: i32) -> (i32, i32) {
    %c0_i32 = arith.constant 0 : i32
    %c0_i32_0 = arith.constant 0 : i32
    %c0_i32_1 = arith.constant 0 : i32
    return %c0_i32, %c0_i32_0 : i32, i32
  }
  func.func @transform_6(%arg0: i32) -> (i32, i32) {
    %c0_i32 = arith.constant 0 : i32
    %c0_i32_0 = arith.constant 0 : i32
    %c0_i32_1 = arith.constant 0 : i32
    return %c0_i32, %c0_i32_0 : i32, i32
  }
  func.func @transform_7(%arg0: i32) -> (i32, i32) {
    %c0_i32 = arith.constant 0 : i32
    %c0_i32_0 = arith.constant 0 : i32
    return %arg0, %c0_i32 : i32, i32
  }
}

</mosaic_0001>

<llo_original>
// kernel: tpu_custom_call.1
$region0: #{tpu_custom_call.1}
  #allocation0 [shape = 'u32[]', space=smem, size = 0x4, offset = 0x4, fixed_abs, tag = 'smem constant byte address 0x4 - core index']
  #allocation1 [shape = 'u32[144,128]{1,0:T(1,128)}', space=vmem, size = 0x12000, scoped, tag = 'internal scratch']
  %s0 = inlined_call_operand.hbm [shape: f32[128,128], index: 0, kind: input, shape index: {}]
  %s1 = inlined_call_operand.hbm [shape: bf16[3,128,128], index: 1, kind: input, shape index: {}]
  %s2 = inlined_call_operand.hbm [shape: bf16[3,128,128], index: 2, kind: input, shape index: {}]
  %s3 = inlined_call_operand.vmem [shape: f32[1,128], index: 3, kind: input, shape index: {}]
  %s4 = inlined_call_operand.vmem [shape: f32[1,128], index: 4, kind: input, shape index: {}]
  %s5 = inlined_call_operand.vmem [shape: f32[1,128], index: 5, kind: input, shape index: {}]
  %s6 = inlined_call_operand.vmem [shape: f32[1,128], index: 6, kind: input, shape index: {}]
  %s7 = inlined_call_operand.hbm [shape: f32[128,128], index: 7, kind: output, shape index: {}]
  %s8 = sld [smem:[#allocation0]]
  $region73: #{tpu_custom_call.1} parent=0
    _
  %s10 = ssub.s32 1, %s8
  %s11 = scalar_select 0, %s10, %s8
  $region1: #{tpu_custom_call.1} parent=0
    #allocation2 [shape = 'u8[65536]{0}', space=vmem, size = 0x10000, scoped, tag = 'input window, operand 0']
    #allocation3 [shape = 's32[2]{0}', space=sflag, size = 0x8, scoped, tag = 'scoped memory for tpu_custom_call.1']
    #allocation4 [shape = 's32[2]{0}', space=sflag, size = 0x8, scoped, tag = 'scoped memory for tpu_custom_call.1']
    #allocation5 [shape = 'u8[98304]{0}', space=vmem, size = 0x18000, scoped, tag = 'input window, operand 1, single buffered']
    #allocation6 [shape = 's32[1]{0}', space=sflag, size = 0x4, scoped, tag = 'scoped memory for tpu_custom_call.1']
    #allocation7 [shape = 'u8[98304]{0}', space=vmem, size = 0x18000, scoped, tag = 'input window, operand 2, single buffered']
    #allocation8 [shape = 'u8[65536]{0}', space=vmem, size = 0x10000, scoped, tag = 'output window, operand 0']
    %12 = vsyncpa [#allocation3], 0
    %s13 = scalar_lea.sflag [#allocation3], 1
    %14 = vsyncpa %s13, 0
    %15 = vsyncpa [#allocation6], 0
    %16 = vsyncpa [#allocation4], 0
    %s17 = scalar_lea.sflag [#allocation4], 1
    %18 = vsyncpa %s17, 0
    loop: start=0, step=1, limit=4
    $region2: #{tpu_custom_call.1} parent=1 // loop_pre_header
      _
    $region3: #{tpu_custom_call.1} parent=1 // loop_header
      %s20 = sphi 0, %s24
      %p21 = scmp.ge.s32.totalorder %s20, 4
      %s30 = sphi 0, %s32
      %s33 = sphi 0, %s30
      %s34 = sphi 0, %s33
      %s50 = sphi 0, %s34
      %s54 = sphi 0, %s54
      %s56 = sphi 0, %s54
      %s57 = sphi 0, %s56
      %s71 = sphi 0, %s57
      %s75 = sphi 0, %s75
      %s77 = sphi 0, %s75
      %s78 = sphi 0, %s77
      %s92 = sphi 0, %s78
      %s96 = sphi 0, %s96
      %s98 = sphi 0, %s96
      %s99 = sphi 0, %s98
      %s113 = sphi 0, %s99
      %s117 = sphi 0, %s117
      %s119 = sphi 0, %s117
      %s120 = sphi 0, %s119
      %s134 = sphi 0, %s120
      %s138 = sphi 0, %s138
      %s140 = sphi 0, %s138
      %s141 = sphi 0, %s140
      %s155 = sphi 0, %s141
      %s159 = sphi 0, %s159
      %s161 = sphi 0, %s159
      %s162 = sphi 0, %s161
      %s176 = sphi 0, %s162
      %s182 = sphi 0, %s184
      %s185 = sphi 0, %s182
      %s186 = sphi 0, %s185
      %s202 = sphi 0, %s186
    $region4: #{tpu_custom_call.1} parent=1 // loop_header_branch
      %23 = sbr.rel (%p21) target = $region8
    $region5: #{tpu_custom_call.1} parent=1 // loop_body
      %s25 = ssub.s32 %s20, 1
      %s26 = ssub.s32 %s20, 2
      %s27 = sadd.s32 %s20, 1
      %s28 = ssub.s32 %s20, %s27
      %p29 = scmp.eq.s32.totalorder %s28, 0
      %s31 = sadd.s32 %s30, 1
      %s32 = scalar_select %p29, %s30, %s31
      %p35 = pneg %p29
      %p36 = scmp.eq.s32.totalorder %s20, 1
      %p37 = por %p35, %p36
      %p38 = scmp.ne.s32.totalorder %s30, %s33
      %p39 = scmp.eq.s32.totalorder %s20, 0
      %p40 = por %p38, %p39
      %p41 = scmp.ne.s32.totalorder %s30, %s33
      %p42 = scmp.eq.s32.totalorder %s25, 1
      %p43 = por %p41, %p42
      %p44 = scmp.ne.s32.totalorder %s33, %s34
      %p45 = scmp.eq.s32.totalorder %s25, 0
      %p46 = por %p44, %p45
      %p47 = scmp.ne.s32.totalorder %s33, %s34
      %p48 = scmp.eq.s32.totalorder %s26, 1
      %p49 = por %p47, %p48
      %p51 = scmp.ne.s32.totalorder %s34, %s50
      %p52 = scmp.eq.s32.totalorder %s26, 0
      %p53 = por %p51, %p52
      %s55 = sadd.s32 %s54, 1
      %p58 = scmp.eq.s32.totalorder %s20, 1
      %p59 = scmp.ne.s32.totalorder %s54, %s56
      %p60 = scmp.eq.s32.totalorder %s20, 0
      %p61 = por %p59, %p60
      %p62 = scmp.ne.s32.totalorder %s54, %s56
      %p63 = scmp.eq.s32.totalorder %s25, 1
      %p64 = por %p62, %p63
      %p65 = scmp.ne.s32.totalorder %s56, %s57
      %p66 = scmp.eq.s32.totalorder %s25, 0
      %p67 = por %p65, %p66
      %p68 = scmp.ne.s32.totalorder %s56, %s57
      %p69 = scmp.eq.s32.totalorder %s26, 1
      %p70 = por %p68, %p69
      %p72 = scmp.ne.s32.totalorder %s57, %s71
      %p73 = scmp.eq.s32.totalorder %s26, 0
      %p74 = por %p72, %p73
      %s76 = sadd.s32 %s75, 1
      %p79 = scmp.eq.s32.totalorder %s20, 1
      %p80 = scmp.ne.s32.totalorder %s75, %s77
      %p81 = scmp.eq.s32.totalorder %s20, 0
      %p82 = por %p80, %p81
      %p83 = scmp.ne.s32.totalorder %s75, %s77
      %p84 = scmp.eq.s32.totalorder %s25, 1
      %p85 = por %p83, %p84
      %p86 = scmp.ne.s32.totalorder %s77, %s78
      %p87 = scmp.eq.s32.totalorder %s25, 0
      %p88 = por %p86, %p87
      %p89 = scmp.ne.s32.totalorder %s77, %s78
      %p90 = scmp.eq.s32.totalorder %s26, 1
      %p91 = por %p89, %p90
      %p93 = scmp.ne.s32.totalorder %s78, %s92
      %p94 = scmp.eq.s32.totalorder %s26, 0
      %p95 = por %p93, %p94
      %s97 = sadd.s32 %s96, 1
      %p100 = scmp.eq.s32.totalorder %s20, 1
      %p101 = scmp.ne.s32.totalorder %s96, %s98
      %p102 = scmp.eq.s32.totalorder %s20, 0
      %p103 = por %p101, %p102
      %p104 = scmp.ne.s32.totalorder %s96, %s98
      %p105 = scmp.eq.s32.totalorder %s25, 1
      %p106 = por %p104, %p105
      %p107 = scmp.ne.s32.totalorder %s98, %s99
      %p108 = scmp.eq.s32.totalorder %s25, 0
      %p109 = por %p107, %p108
      %p110 = scmp.ne.s32.totalorder %s98, %s99
      %p111 = scmp.eq.s32.totalorder %s26, 1
      %p112 = por %p110, %p111
      %p114 = scmp.ne.s32.totalorder %s99, %s113
      %p115 = scmp.eq.s32.totalorder %s26, 0
      %p116 = por %p114, %p115
      %s118 = sadd.s32 %s117, 1
      %p121 = scmp.eq.s32.totalorder %s20, 1
      %p122 = scmp.ne.s32.totalorder %s117, %s119
      %p123 = scmp.eq.s32.totalorder %s20, 0
      %p124 = por %p122, %p123
      %p125 = scmp.ne.s32.totalorder %s117, %s119
      %p126 = scmp.eq.s32.totalorder %s25, 1
      %p127 = por %p125, %p126
      %p128 = scmp.ne.s32.totalorder %s119, %s120
      %p129 = scmp.eq.s32.totalorder %s25, 0
      %p130 = por %p128, %p129
      %p131 = scmp.ne.s32.totalorder %s119, %s120
      %p132 = scmp.eq.s32.totalorder %s26, 1
      %p133 = por %p131, %p132
      %p135 = scmp.ne.s32.totalorder %s120, %s134
      %p136 = scmp.eq.s32.totalorder %s26, 0
      %p137 = por %p135, %p136
      %s139 = sadd.s32 %s138, 1
      %p142 = scmp.eq.s32.totalorder %s20, 1
      %p143 = scmp.ne.s32.totalorder %s138, %s140
      %p144 = scmp.eq.s32.totalorder %s20, 0
      %p145 = por %p143, %p144
      %p146 = scmp.ne.s32.totalorder %s138, %s140
      %p147 = scmp.eq.s32.totalorder %s25, 1
      %p148 = por %p146, %p147
      %p149 = scmp.ne.s32.totalorder %s140, %s141
      %p150 = scmp.eq.s32.totalorder %s25, 0
      %p151 = por %p149, %p150
      %p152 = scmp.ne.s32.totalorder %s140, %s141
      %p153 = scmp.eq.s32.totalorder %s26, 1
      %p154 = por %p152, %p153
      %p156 = scmp.ne.s32.totalorder %s141, %s155
      %p157 = scmp.eq.s32.totalorder %s26, 0
      %p158 = por %p156, %p157
      %s160 = sadd.s32 %s159, 1
      %p163 = scmp.eq.s32.totalorder %s20, 1
      %p164 = scmp.ne.s32.totalorder %s159, %s161
      %p165 = scmp.eq.s32.totalorder %s20, 0
      %p166 = por %p164, %p165
      %p167 = scmp.ne.s32.totalorder %s159, %s161
      %p168 = scmp.eq.s32.totalorder %s25, 1
      %p169 = por %p167, %p168
      %p170 = scmp.ne.s32.totalorder %s161, %s162
      %p171 = scmp.eq.s32.totalorder %s25, 0
      %p172 = por %p170, %p171
      %p173 = scmp.ne.s32.totalorder %s161, %s162
      %p174 = scmp.eq.s32.totalorder %s26, 1
      %p175 = por %p173, %p174
      %p177 = scmp.ne.s32.totalorder %s162, %s176
      %p178 = scmp.eq.s32.totalorder %s26, 0
      %p179 = por %p177, %p178
      %s180 = ssub.s32 %s20, %s27
      %p181 = scmp.eq.s32.totalorder %s180, 0
      %s183 = sadd.s32 %s182, 1
      %s184 = scalar_select %p181, %s182, %s183
      %p187 = pneg %p181
      %p188 = scmp.eq.s32.totalorder %s20, 1
      %p189 = por %p187, %p188
      %p190 = scmp.ne.s32.totalorder %s182, %s185
      %p191 = scmp.eq.s32.totalorder %s20, 0
      %p192 = por %p190, %p191
      %p193 = scmp.ne.s32.totalorder %s182, %s185
      %p194 = scmp.eq.s32.totalorder %s25, 1
      %p195 = por %p193, %p194
      %p196 = scmp.ne.s32.totalorder %s185, %s186
      %p197 = scmp.eq.s32.totalorder %s25, 0
      %p198 = por %p196, %p197
      %p199 = scmp.ne.s32.totalorder %s185, %s186
      %p200 = scmp.eq.s32.totalorder %s26, 1
      %p201 = por %p199, %p200
      %p203 = scmp.ne.s32.totalorder %s186, %s202
      %p204 = scmp.eq.s32.totalorder %s26, 0
      %p205 = por %p203, %p204
      %p206 = scmp.le.s32.totalorder 1, %s20
      %p207 = scmp.lt.s32.totalorder %s20, 3
      %p208 = pnand %p206, %p207
      %p209 = pneg %p208
      // Predicated region
      $region9: #{tpu_custom_call.1} parent=5 // pred_check
        _
      $region10: #{tpu_custom_call.1} parent=5 // pred_check_branch
        %211 = sbr.rel (%p208) target = $region12
      $region11: #{tpu_custom_call.1} parent=5 // pred_region
        %s212 = ssub.s32 %s20, 1
        // Predicated region
        $region13: #{tpu_custom_call.1} parent=11 // pred_check
          %p213 = pneg %p67
        $region14: #{tpu_custom_call.1} parent=11 // pred_check_branch
          %215 = sbr.rel (%p213) target = $region16
        $region15: #{tpu_custom_call.1} parent=11 // pred_region
          %s217 = ssub.s32 3072, 3072
          %218 = vsyncadd [#allocation6], %s217
          %s219 = sshll.u32 [#allocation5], 4
          %s220 = int_to_ptr.vmem [resolvable:$true] %s219
          %225 = dma.hbm_to_vmem [thread:$0]  %s1, 3072, %s220, [#allocation6], 64, 64, 4
        $region16: #{tpu_custom_call.1} parent=11 // pred_fallthru
          _
        // Predicated region
        $region17: #{tpu_custom_call.1} parent=11 // pred_check
          %p226 = pneg %p88
        $region18: #{tpu_custom_call.1} parent=11 // pred_check_branch
          %228 = sbr.rel (%p226) target = $region20
        $region19: #{tpu_custom_call.1} parent=11 // pred_region
          %s230 = ssub.s32 3072, 3072
          %231 = vsyncadd [#allocation6], %s230
          %s232 = sshll.u32 [#allocation7], 4
          %s233 = int_to_ptr.vmem [resolvable:$true] %s232
          %238 = dma.hbm_to_vmem [thread:$0]  %s2, 3072, %s233, [#allocation6], 64, 64, 4
        $region20: #{tpu_custom_call.1} parent=11 // pred_fallthru
          _
        // Predicated region
        $region21: #{tpu_custom_call.1} parent=11 // pred_check
          %p239 = pneg %p109
        $region22: #{tpu_custom_call.1} parent=11 // pred_check_branch
          %241 = sbr.rel (%p239) target = $region24
        $region23: #{tpu_custom_call.1} parent=11 // pred_region
          _
        $region24: #{tpu_custom_call.1} parent=11 // pred_fallthru
          _
        // Predicated region
        $region25: #{tpu_custom_call.1} parent=11 // pred_check
          %p242 = pneg %p130
        $region26: #{tpu_custom_call.1} parent=11 // pred_check_branch
          %244 = sbr.rel (%p242) target = $region28
        $region27: #{tpu_custom_call.1} parent=11 // pred_region
          _
        $region28: #{tpu_custom_call.1} parent=11 // pred_fallthru
          _
        // Predicated region
        $region29: #{tpu_custom_call.1} parent=11 // pred_check
          %p245 = pneg %p151
        $region30: #{tpu_custom_call.1} parent=11 // pred_check_branch
          %247 = sbr.rel (%p245) target = $region32
        $region31: #{tpu_custom_call.1} parent=11 // pred_region
          _
        $region32: #{tpu_custom_call.1} parent=11 // pred_fallthru
          _
        // Predicated region
        $region33: #{tpu_custom_call.1} parent=11 // pred_check
          %p248 = pneg %p172
        $region34: #{tpu_custom_call.1} parent=11 // pred_check_branch
          %250 = sbr.rel (%p248) target = $region36
        $region35: #{tpu_custom_call.1} parent=11 // pred_region
          _
        $region36: #{tpu_custom_call.1} parent=11 // pred_fallthru
          _
      $region12: #{tpu_custom_call.1} parent=5 // pred_fallthru
        _
      %p251 = scmp.lt.s32.totalorder %s20, 2
      // Predicated region
      $region37: #{tpu_custom_call.1} parent=5 // pred_check
        %p252 = pneg %p251
      $region38: #{tpu_custom_call.1} parent=5 // pred_check_branch
        %254 = sbr.rel (%p252) target = $region40
      $region39: #{tpu_custom_call.1} parent=5 // pred_region
        // Predicated region
        $region41: #{tpu_custom_call.1} parent=39 // pred_check
          %p255 = pneg %p40
        $region42: #{tpu_custom_call.1} parent=39 // pred_check_branch
          %257 = sbr.rel (%p255) target = $region44
        $region43: #{tpu_custom_call.1} parent=39 // pred_region
          %s258 = sand.u32 %s30, 1
          %s259 = scalar_lea.sflag [#allocation3], %s258
          %s260 = sand.u32 %s30, 1
          %s261 = smul.addr %s260, 64
          %s262 = scalar_lea.vmem [#allocation2], %s261
          %s263 = smul.u32 8, %s20
          %s265 = ssub.s32 1024, 1024
          %266 = vsyncadd %s259, %s265
          %s267 = smul.addr %s263, 128
          %s268 = scalar_lea.hbm %s0, %s267
          %s269 = sshll.u32 %s262, 4
          %s270 = int_to_ptr.vmem [resolvable:$true] %s269
          %275 = dma.hbm_to_vmem [thread:$0]  %s268, 1024, %s270, %s259, 128, 128, 8
        $region44: #{tpu_custom_call.1} parent=39 // pred_fallthru
          _
      $region40: #{tpu_custom_call.1} parent=5 // pred_fallthru
        _
      %p276 = scmp.le.s32.totalorder 1, %s20
      %p277 = scmp.lt.s32.totalorder %s20, 3
      %p278 = pnand %p276, %p277
      %p279 = pneg %p278
      // Predicated region
      $region45: #{tpu_custom_call.1} parent=5 // pred_check
        _
      $region46: #{tpu_custom_call.1} parent=5 // pred_check_branch
        %281 = sbr.rel (%p278) target = $region48
      $region47: #{tpu_custom_call.1} parent=5 // pred_region
        %s282 = ssub.s32 %s20, 1
        %s283 = sand.u32 %s33, 1
        %s284 = scalar_lea.sflag [#allocation3], %s283
        %s285 = sand.u32 %s33, 1
        %s286 = smul.addr %s285, 64
        %s287 = scalar_lea.vmem [#allocation2], %s286
        // Predicated region
        $region49: #{tpu_custom_call.1} parent=47 // pred_check
          %p288 = pneg %p46
        $region50: #{tpu_custom_call.1} parent=47 // pred_check_branch
          %290 = sbr.rel (%p288) target = $region52
        $region51: #{tpu_custom_call.1} parent=47 // pred_region
          %291 = dma.done %s284, 1024
        $region52: #{tpu_custom_call.1} parent=47 // pred_fallthru
          _
        // Predicated region
        $region53: #{tpu_custom_call.1} parent=47 // pred_check
          %p292 = pneg %p67
        $region54: #{tpu_custom_call.1} parent=47 // pred_check_branch
          %294 = sbr.rel (%p292) target = $region56
        $region55: #{tpu_custom_call.1} parent=47 // pred_region
          %295 = dma.done [#allocation6], 3072
        $region56: #{tpu_custom_call.1} parent=47 // pred_fallthru
          _
        // Predicated region
        $region57: #{tpu_custom_call.1} parent=47 // pred_check
          %p296 = pneg %p88
        $region58: #{tpu_custom_call.1} parent=47 // pred_check_branch
          %298 = sbr.rel (%p296) target = $region60
        $region59: #{tpu_custom_call.1} parent=47 // pred_region
          %299 = dma.done [#allocation6], 3072
        $region60: #{tpu_custom_call.1} parent=47 // pred_fallthru
          _
        %s300 = sand.u32 %s33, 1
        %s301 = scalar_lea.sflag [#allocation3], %s300
        %s302 = sand.u32 %s33, 1
        %s303 = smul.addr %s302, 64
        %s304 = scalar_lea.vmem [#allocation2], %s303
        %p305 = pneg %p46
        %p306 = pneg %p43
        %p307 = pneg %p67
        %p308 = pneg %p64
        %p309 = pneg %p88
        %p310 = pneg %p85
        %p311 = pneg %p109
        %p312 = pneg %p106
        %p313 = pneg %p130
        %p314 = pneg %p127
        %p315 = pneg %p151
        %p316 = pneg %p148
        %p317 = pneg %p172
        %p318 = pneg %p169
        %p319 = pneg %p198
        %p320 = pneg %p195
        %s321 = sand.u32 %s185, 1
        %s322 = scalar_lea.sflag [#allocation4], %s321
        %s323 = sand.u32 %s185, 1
        %s324 = smul.addr %s323, 64
        %s325 = scalar_lea.vmem [#allocation8], %s324
        %s326 = smul.u32 8, %s25
        %s327 = smul.u32 8, %s25
        %v329 = vld [vmem:[%s287] sm:$0xff]
        %v330 = vld [vmem:[%s287 + $0x8] sm:$0xff]
        %v331 = vld [vmem:[%s287 + $0x10] sm:$0xff]
        %v332 = vld [vmem:[%s287 + $0x18] sm:$0xff]
        %v333 = vld [vmem:[%s287 + $0x20] sm:$0xff]
        %v334 = vld [vmem:[%s287 + $0x28] sm:$0xff]
        %v335 = vld [vmem:[%s287 + $0x30] sm:$0xff]
        %v336 = vld [vmem:[%s287 + $0x38] sm:$0xff]
        %v337 = vlaneseq
        %v338 = vshrl.u32 %v337, 7
        %v339 = vadd.s32 %v338, 8
        %v340 = vadd.s32 %v338, 16
        %v341 = vadd.s32 %v338, 24
        %v342 = vadd.s32 %v338, 32
        %v343 = vadd.s32 %v338, 40
        %v344 = vadd.s32 %v338, 48
        %v345 = vadd.s32 %v338, 56
        %v346 = vand.u32 %v338, 15
        %v347 = vand.u32 %v339, 15
        %v348 = vand.u32 %v340, 15
        %v349 = vand.u32 %v341, 15
        %v350 = vand.u32 %v342, 15
        %v351 = vand.u32 %v343, 15
        %v352 = vand.u32 %v344, 15
        %v353 = vand.u32 %v345, 15
        %vm354 = vcmp.ne.s32.totalorder %v346, 0
        %vm355 = vcmp.ne.s32.totalorder %v347, 0
        %vm356 = vcmp.ne.s32.totalorder %v348, 0
        %vm357 = vcmp.ne.s32.totalorder %v349, 0
        %vm358 = vcmp.ne.s32.totalorder %v350, 0
        %vm359 = vcmp.ne.s32.totalorder %v351, 0
        %vm360 = vcmp.ne.s32.totalorder %v352, 0
        %vm361 = vcmp.ne.s32.totalorder %v353, 0
        %vm362 = vcmp.ne.s32.totalorder %v346, 15
        %vm363 = vcmp.ne.s32.totalorder %v347, 15
        %vm364 = vcmp.ne.s32.totalorder %v348, 15
        %vm365 = vcmp.ne.s32.totalorder %v349, 15
        %vm366 = vcmp.ne.s32.totalorder %v350, 15
        %vm367 = vcmp.ne.s32.totalorder %v351, 15
        %vm368 = vcmp.ne.s32.totalorder %v352, 15
        %vm369 = vcmp.ne.s32.totalorder %v353, 15
        %v370 = vrot.slane %v329, 7
        %v371 = vrot.slane %v330, 7
        %v372 = vrot.slane %v331, 7
        %v373 = vrot.slane %v332, 7
        %v374 = vrot.slane %v333, 7
        %v375 = vrot.slane %v334, 7
        %v376 = vrot.slane %v335, 7
        %v377 = vrot.slane %v336, 7
        %vm378 = vcmp.lt.s32.totalorder %v338, 1
        %v379 = vsel %vm378, %v376, %v377
        %v380 = vsel %vm378, %v375, %v376
        %v381 = vsel %vm378, %v374, %v375
        %v382 = vsel %vm378, %v373, %v374
        %v383 = vsel %vm378, %v372, %v373
        %v384 = vsel %vm378, %v371, %v372
        %v385 = vsel %vm378, %v370, %v371
        %v386 = vsel %vm378, %v377, %v370
        %v387 = vsel %vm354, %v386, 0.0
        %v388 = vsel %vm355, %v385, 0.0
        %v389 = vsel %vm356, %v384, 0.0
        %v390 = vsel %vm357, %v383, 0.0
        %v391 = vsel %vm358, %v382, 0.0
        %v392 = vsel %vm359, %v381, 0.0
        %v393 = vsel %vm360, %v380, 0.0
        %v394 = vsel %vm361, %v379, 0.0
        %v395 = vrot.slane %v329, 1
        %v396 = vrot.slane %v330, 1
        %v397 = vrot.slane %v331, 1
        %v398 = vrot.slane %v332, 1
        %v399 = vrot.slane %v333, 1
        %v400 = vrot.slane %v334, 1
        %v401 = vrot.slane %v335, 1
        %v402 = vrot.slane %v336, 1
        %vm403 = vcmp.lt.s32.totalorder %v338, 7
        %v404 = vsel %vm403, %v401, %v402
        %v405 = vsel %vm403, %v400, %v401
        %v406 = vsel %vm403, %v399, %v400
        %v407 = vsel %vm403, %v398, %v399
        %v408 = vsel %vm403, %v397, %v398
        %v409 = vsel %vm403, %v396, %v397
        %v410 = vsel %vm403, %v395, %v396
        %v411 = vsel %vm403, %v402, %v395
        %v412 = vsel %vm362, %v410, 0.0
        %v413 = vsel %vm363, %v409, 0.0
        %v414 = vsel %vm364, %v408, 0.0
        %v415 = vsel %vm365, %v407, 0.0
        %v416 = vsel %vm366, %v406, 0.0
        %v417 = vsel %vm367, %v405, 0.0
        %v418 = vsel %vm368, %v404, 0.0
        %v419 = vsel %vm369, %v411, 0.0
        %v420 = vpack.c.bf16 %v388, %v387
        %v421 = vpack.c.bf16 %v390, %v389
        %v422 = vpack.c.bf16 %v392, %v391
        %v423 = vpack.c.bf16 %v394, %v393
        %v424 = vld [vmem:[#allocation5] sm:$0xf]
        %v425 = vld [vmem:[#allocation5 + $0x4] sm:$0xf]
        %v426 = vld [vmem:[#allocation5 + $0x8] sm:$0xf]
        %v427 = vld [vmem:[#allocation5 + $0xc] sm:$0xf]
        %v428 = vld [vmem:[#allocation5 + $0x10] sm:$0xf]
        %v429 = vld [vmem:[#allocation5 + $0x14] sm:$0xf]
        %v430 = vld [vmem:[#allocation5 + $0x18] sm:$0xf]
        %v431 = vld [vmem:[#allocation5 + $0x1c] sm:$0xf]
        %v432 = vld [vmem:[#allocation5 + $0x20] sm:$0xf]
        %v433 = vld [vmem:[#allocation5 + $0x24] sm:$0xf]
        %v434 = vld [vmem:[#allocation5 + $0x28] sm:$0xf]
        %v435 = vld [vmem:[#allocation5 + $0x2c] sm:$0xf]
        %v436 = vld [vmem:[#allocation5 + $0x30] sm:$0xf]
        %v437 = vld [vmem:[#allocation5 + $0x34] sm:$0xf]
        %v438 = vld [vmem:[#allocation5 + $0x38] sm:$0xf]
        %v439 = vld [vmem:[#allocation5 + $0x3c] sm:$0xf]
        %v440 = vpack.c.bf16 %v330, %v329
        %v441 = vpack.c.bf16 %v332, %v331
        %v442 = vpack.c.bf16 %v334, %v333
        %v443 = vpack.c.bf16 %v336, %v335
        %s444 = scalar_lea.vmem [#allocation5], 64
        %v445 = vld [vmem:[%s444] sm:$0xf]
        %v446 = vld [vmem:[%s444 + $0x4] sm:$0xf]
        %v447 = vld [vmem:[%s444 + $0x8] sm:$0xf]
        %v448 = vld [vmem:[%s444 + $0xc] sm:$0xf]
        %v449 = vld [vmem:[%s444 + $0x10] sm:$0xf]
        %v450 = vld [vmem:[%s444 + $0x14] sm:$0xf]
        %v451 = vld [vmem:[%s444 + $0x18] sm:$0xf]
        %v452 = vld [vmem:[%s444 + $0x1c] sm:$0xf]
        %v453 = vld [vmem:[%s444 + $0x20] sm:$0xf]
        %v454 = vld [vmem:[%s444 + $0x24] sm:$0xf]
        %v455 = vld [vmem:[%s444 + $0x28] sm:$0xf]
        %v456 = vld [vmem:[%s444 + $0x2c] sm:$0xf]
        %v457 = vld [vmem:[%s444 + $0x30] sm:$0xf]
        %v458 = vld [vmem:[%s444 + $0x34] sm:$0xf]
        %v459 = vld [vmem:[%s444 + $0x38] sm:$0xf]
        %v460 = vld [vmem:[%s444 + $0x3c] sm:$0xf]
        %v477 = vunpack.c.l.b16 %v445
        %v478 = vunpack.c.l.b16 %v446
        %v479 = vunpack.c.l.b16 %v447
        %v480 = vunpack.c.l.b16 %v448
        %v481 = vunpack.c.l.b16 %v449
        %v482 = vunpack.c.l.b16 %v450
        %v483 = vunpack.c.l.b16 %v451
        %v484 = vunpack.c.l.b16 %v452
        %v485 = vunpack.c.l.b16 %v453
        %v486 = vunpack.c.l.b16 %v454
        %v487 = vunpack.c.l.b16 %v455
        %v488 = vunpack.c.l.b16 %v456
        %v489 = vunpack.c.l.b16 %v457
        %v490 = vunpack.c.l.b16 %v458
        %v491 = vunpack.c.l.b16 %v459
        %v492 = vunpack.c.l.b16 %v460
        %v493 = vpack.c.b16 %v478, %v477
        %v494 = vpack.c.b16 %v480, %v479
        %v495 = vpack.c.b16 %v482, %v481
        %v496 = vpack.c.b16 %v484, %v483
        %v497 = vpack.c.b16 %v486, %v485
        %v498 = vpack.c.b16 %v488, %v487
        %v499 = vpack.c.b16 %v490, %v489
        %v500 = vpack.c.b16 %v492, %v491
        %509 = vmatprep.subr.bf16.mxu0 0
        %510 = vmatpush1.bf16.msra.mxu0 %v493
        %511 = vmatprep.subr.bf16.mxu0 0
        %512 = vmatpush1.bf16.msra.mxu0 %v494
        %513 = vmatprep.subr.bf16.mxu0 0
        %514 = vmatpush1.bf16.msra.mxu0 %v495
        %515 = vmatprep.subr.bf16.mxu0 0
        %516 = vmatpush1.bf16.msra.mxu0 %v496
        %517 = vmatprep.subr.bf16.mxu0 0
        %518 = vmatpush1.bf16.msra.mxu0 %v497
        %519 = vmatprep.subr.bf16.mxu0 0
        %520 = vmatpush1.bf16.msra.mxu0 %v498
        %521 = vmatprep.subr.bf16.mxu0 0
        %522 = vmatpush1.bf16.msra.mxu0 %v499
        %523 = vmatprep.subr.bf16.mxu0 0
        %524 = vmatpush1.bf16.msra.mxu0 %v500
        %525 = vmatprep.subr.bf16.mxu0 0
        %526 = vmatpush1.bf16.msra.mxu0 0
        %527 = vmatprep.subr.bf16.mxu0 0
        %528 = vmatpush1.bf16.msra.mxu0 0
        %529 = vmatprep.subr.bf16.mxu0 0
        %530 = vmatpush1.bf16.msra.mxu0 0
        %531 = vmatprep.subr.bf16.mxu0 0
        %532 = vmatpush1.bf16.msra.mxu0 0
        %533 = vmatprep.subr.bf16.mxu0 0
        %534 = vmatpush1.bf16.msra.mxu0 0
        %535 = vmatprep.subr.bf16.mxu0 0
        %536 = vmatpush1.bf16.msra.mxu0 0
        %537 = vmatprep.subr.bf16.mxu0 0
        %538 = vmatpush1.bf16.msra.mxu0 0
        %539 = vmatprep.subr.bf16.mxu0 0
        %540 = vmatpush1.bf16.msra.mxu0 0
        %541 = vmatprep.mubr.bf16.mxu0 0
        %542 = vmatmul.mubr.bf16.gmra.mrb[0].mxu0 %v440
        %v543 = vpop.f32.mrb[0].mxu0
        %v544 = vadd.f32 0.0, %v543
        %v545 = vpop.f32.mrb[0].mxu0
        %v546 = vpop.f32.mrb[0].mxu0
        %v547 = vadd.f32 0.0, %v546
        %v548 = vpop.f32.mrb[0].mxu0
        %549 = vmatprep.mubr.bf16.mxu0 0
        %550 = vmatmul.mubr.bf16.gmra.mrb[0].mxu0 %v441
        %v551 = vpop.f32.mrb[0].mxu0
        %v552 = vadd.f32 0.0, %v551
        %v553 = vpop.f32.mrb[0].mxu0
        %v554 = vpop.f32.mrb[0].mxu0
        %v555 = vadd.f32 0.0, %v554
        %v556 = vpop.f32.mrb[0].mxu0
        %557 = vmatprep.mubr.bf16.mxu0 0
        %558 = vmatmul.mubr.bf16.gmra.mrb[0].mxu0 %v442
        %v559 = vpop.f32.mrb[0].mxu0
        %v560 = vadd.f32 0.0, %v559
        %v561 = vpop.f32.mrb[0].mxu0
        %v562 = vpop.f32.mrb[0].mxu0
        %v563 = vadd.f32 0.0, %v562
        %v564 = vpop.f32.mrb[0].mxu0
        %565 = vmatprep.mubr.bf16.mxu0 0
        %566 = vmatmul.mubr.bf16.gmra.mrb[0].mxu0 %v443
        %v567 = vpop.f32.mrb[0].mxu0
        %v568 = vadd.f32 0.0, %v567
        %v569 = vpop.f32.mrb[0].mxu0
        %v570 = vpop.f32.mrb[0].mxu0
        %v571 = vadd.f32 0.0, %v570
        %v572 = vpop.f32.mrb[0].mxu0
        %573 = vdwg.mxu0
        %v590 = vunpack.c.l.b16 %v424
        %v591 = vunpack.c.l.b16 %v425
        %v592 = vunpack.c.l.b16 %v426
        %v593 = vunpack.c.l.b16 %v427
        %v594 = vunpack.c.l.b16 %v428
        %v595 = vunpack.c.l.b16 %v429
        %v596 = vunpack.c.l.b16 %v430
        %v597 = vunpack.c.l.b16 %v431
        %v598 = vunpack.c.l.b16 %v432
        %v599 = vunpack.c.l.b16 %v433
        %v600 = vunpack.c.l.b16 %v434
        %v601 = vunpack.c.l.b16 %v435
        %v602 = vunpack.c.l.b16 %v436
        %v603 = vunpack.c.l.b16 %v437
        %v604 = vunpack.c.l.b16 %v438
        %v605 = vunpack.c.l.b16 %v439
        %v606 = vpack.c.b16 %v591, %v590
        %v607 = vpack.c.b16 %v593, %v592
        %v608 = vpack.c.b16 %v595, %v594
        %v609 = vpack.c.b16 %v597, %v596
        %v610 = vpack.c.b16 %v599, %v598
        %v611 = vpack.c.b16 %v601, %v600
        %v612 = vpack.c.b16 %v603, %v602
        %v613 = vpack.c.b16 %v605, %v604
        %622 = vmatprep.subr.bf16.mxu0 0
        %623 = vmatpush1.bf16.msra.mxu0 %v606
        %624 = vmatprep.subr.bf16.mxu0 0
        %625 = vmatpush1.bf16.msra.mxu0 %v607
        %626 = vmatprep.subr.bf16.mxu0 0
        %627 = vmatpush1.bf16.msra.mxu0 %v608
        %628 = vmatprep.subr.bf16.mxu0 0
        %629 = vmatpush1.bf16.msra.mxu0 %v609
        %630 = vmatprep.subr.bf16.mxu0 0
        %631 = vmatpush1.bf16.msra.mxu0 %v610
        %632 = vmatprep.subr.bf16.mxu0 0
        %633 = vmatpush1.bf16.msra.mxu0 %v611
        %634 = vmatprep.subr.bf16.mxu0 0
        %635 = vmatpush1.bf16.msra.mxu0 %v612
        %636 = vmatprep.subr.bf16.mxu0 0
        %637 = vmatpush1.bf16.msra.mxu0 %v613
        %638 = vmatprep.subr.bf16.mxu0 0
        %639 = vmatpush1.bf16.msra.mxu0 0
        %640 = vmatprep.subr.bf16.mxu0 0
        %641 = vmatpush1.bf16.msra.mxu0 0
        %642 = vmatprep.subr.bf16.mxu0 0
        %643 = vmatpush1.bf16.msra.mxu0 0
        %644 = vmatprep.subr.bf16.mxu0 0
        %645 = vmatpush1.bf16.msra.mxu0 0
        %646 = vmatprep.subr.bf16.mxu0 0
        %647 = vmatpush1.bf16.msra.mxu0 0
        %648 = vmatprep.subr.bf16.mxu0 0
        %649 = vmatpush1.bf16.msra.mxu0 0
        %650 = vmatprep.subr.bf16.mxu0 0
        %651 = vmatpush1.bf16.msra.mxu0 0
        %652 = vmatprep.subr.bf16.mxu0 0
        %653 = vmatpush1.bf16.msra.mxu0 0
        %654 = vmatprep.mubr.bf16.mxu0 0
        %655 = vmatmul.mubr.bf16.gmra.mrb[0].mxu0 %v420
        %v656 = vpop.f32.mrb[0].mxu0
        %v657 = vadd.f32 %v544, %v656
        %v658 = vpop.f32.mrb[0].mxu0
        %v659 = vpop.f32.mrb[0].mxu0
        %v660 = vadd.f32 %v547, %v659
        %v661 = vpop.f32.mrb[0].mxu0
        %662 = vmatprep.mubr.bf16.mxu0 0
        %663 = vmatmul.mubr.bf16.gmra.mrb[0].mxu0 %v421
        %v664 = vpop.f32.mrb[0].mxu0
        %v665 = vadd.f32 %v552, %v664
        %v666 = vpop.f32.mrb[0].mxu0
        %v667 = vpop.f32.mrb[0].mxu0
        %v668 = vadd.f32 %v555, %v667
        %v669 = vpop.f32.mrb[0].mxu0
        %670 = vmatprep.mubr.bf16.mxu0 0
        %671 = vmatmul.mubr.bf16.gmra.mrb[0].mxu0 %v422
        %v672 = vpop.f32.mrb[0].mxu0
        %v673 = vadd.f32 %v560, %v672
        %v674 = vpop.f32.mrb[0].mxu0
        %v675 = vpop.f32.mrb[0].mxu0
        %v676 = vadd.f32 %v563, %v675
        %v677 = vpop.f32.mrb[0].mxu0
        %678 = vmatprep.mubr.bf16.mxu0 0
        %679 = vmatmul.mubr.bf16.gmra.mrb[0].mxu0 %v423
        %v680 = vpop.f32.mrb[0].mxu0
        %v681 = vadd.f32 %v568, %v680
        %v682 = vpop.f32.mrb[0].mxu0
        %v683 = vpop.f32.mrb[0].mxu0
        %v684 = vadd.f32 %v571, %v683
        %v685 = vpop.f32.mrb[0].mxu0
        %686 = vdwg.mxu0
        %v687 = vpack.c.bf16 %v413, %v412
        %v688 = vpack.c.bf16 %v415, %v414
        %v689 = vpack.c.bf16 %v417, %v416
        %v690 = vpack.c.bf16 %v419, %v418
        %s691 = scalar_lea.vmem [#allocation5], 128
        %v692 = vld [vmem:[%s691] sm:$0xf]
        %v693 = vld [vmem:[%s691 + $0x4] sm:$0xf]
        %v694 = vld [vmem:[%s691 + $0x8] sm:$0xf]
        %v695 = vld [vmem:[%s691 + $0xc] sm:$0xf]
        %v696 = vld [vmem:[%s691 + $0x10] sm:$0xf]
        %v697 = vld [vmem:[%s691 + $0x14] sm:$0xf]
        %v698 = vld [vmem:[%s691 + $0x18] sm:$0xf]
        %v699 = vld [vmem:[%s691 + $0x1c] sm:$0xf]
        %v700 = vld [vmem:[%s691 + $0x20] sm:$0xf]
        %v701 = vld [vmem:[%s691 + $0x24] sm:$0xf]
        %v702 = vld [vmem:[%s691 + $0x28] sm:$0xf]
        %v703 = vld [vmem:[%s691 + $0x2c] sm:$0xf]
        %v704 = vld [vmem:[%s691 + $0x30] sm:$0xf]
        %v705 = vld [vmem:[%s691 + $0x34] sm:$0xf]
        %v706 = vld [vmem:[%s691 + $0x38] sm:$0xf]
        %v707 = vld [vmem:[%s691 + $0x3c] sm:$0xf]
        %v724 = vunpack.c.l.b16 %v692
        %v725 = vunpack.c.l.b16 %v693
        %v726 = vunpack.c.l.b16 %v694
        %v727 = vunpack.c.l.b16 %v695
        %v728 = vunpack.c.l.b16 %v696
        %v729 = vunpack.c.l.b16 %v697
        %v730 = vunpack.c.l.b16 %v698
        %v731 = vunpack.c.l.b16 %v699
        %v732 = vunpack.c.l.b16 %v700
        %v733 = vunpack.c.l.b16 %v701
        %v734 = vunpack.c.l.b16 %v702
        %v735 = vunpack.c.l.b16 %v703
        %v736 = vunpack.c.l.b16 %v704
        %v737 = vunpack.c.l.b16 %v705
        %v738 = vunpack.c.l.b16 %v706
        %v739 = vunpack.c.l.b16 %v707
        %v740 = vpack.c.b16 %v725, %v724
        %v741 = vpack.c.b16 %v727, %v726
        %v742 = vpack.c.b16 %v729, %v728
        %v743 = vpack.c.b16 %v731, %v730
        %v744 = vpack.c.b16 %v733, %v732
        %v745 = vpack.c.b16 %v735, %v734
        %v746 = vpack.c.b16 %v737, %v736
        %v747 = vpack.c.b16 %v739, %v738
        %756 = vmatprep.subr.bf16.mxu0 0
        %757 = vmatpush1.bf16.msra.mxu0 %v740
        %758 = vmatprep.subr.bf16.mxu0 0
        %759 = vmatpush1.bf16.msra.mxu0 %v741
        %760 = vmatprep.subr.bf16.mxu0 0
        %761 = vmatpush1.bf16.msra.mxu0 %v742
        %762 = vmatprep.subr.bf16.mxu0 0
        %763 = vmatpush1.bf16.msra.mxu0 %v743
        %764 = vmatprep.subr.bf16.mxu0 0
        %765 = vmatpush1.bf16.msra.mxu0 %v744
        %766 = vmatprep.subr.bf16.mxu0 0
        %767 = vmatpush1.bf16.msra.mxu0 %v745
        %768 = vmatprep.subr.bf16.mxu0 0
        %769 = vmatpush1.bf16.msra.mxu0 %v746
        %770 = vmatprep.subr.bf16.mxu0 0
        %771 = vmatpush1.bf16.msra.mxu0 %v747
        %772 = vmatprep.subr.bf16.mxu0 0
        %773 = vmatpush1.bf16.msra.mxu0 0
        %774 = vmatprep.subr.bf16.mxu0 0
        %775 = vmatpush1.bf16.msra.mxu0 0
        %776 = vmatprep.subr.bf16.mxu0 0
        %777 = vmatpush1.bf16.msra.mxu0 0
        %778 = vmatprep.subr.bf16.mxu0 0
        %779 = vmatpush1.bf16.msra.mxu0 0
        %780 = vmatprep.subr.bf16.mxu0 0
        %781 = vmatpush1.bf16.msra.mxu0 0
        %782 = vmatprep.subr.bf16.mxu0 0
        %783 = vmatpush1.bf16.msra.mxu0 0
        %784 = vmatprep.subr.bf16.mxu0 0
        %785 = vmatpush1.bf16.msra.mxu0 0
        %786 = vmatprep.subr.bf16.mxu0 0
        %787 = vmatpush1.bf16.msra.mxu0 0
        %788 = vmatprep.mubr.bf16.mxu0 0
        %789 = vmatmul.mubr.bf16.gmra.mrb[0].mxu0 %v687
        %v790 = vpop.f32.mrb[0].mxu0
        %v791 = vadd.f32 0.0, %v790
        %v792 = vpop.f32.mrb[0].mxu0
        %v793 = vpop.f32.mrb[0].mxu0
        %v794 = vadd.f32 0.0, %v793
        %v795 = vpop.f32.mrb[0].mxu0
        %796 = vmatprep.mubr.bf16.mxu0 0
        %797 = vmatmul.mubr.bf16.gmra.mrb[0].mxu0 %v688
        %v798 = vpop.f32.mrb[0].mxu0
        %v799 = vadd.f32 0.0, %v798
        %v800 = vpop.f32.mrb[0].mxu0
        %v801 = vpop.f32.mrb[0].mxu0
        %v802 = vadd.f32 0.0, %v801
        %v803 = vpop.f32.mrb[0].mxu0
        %804 = vmatprep.mubr.bf16.mxu0 0
        %805 = vmatmul.mubr.bf16.gmra.mrb[0].mxu0 %v689
        %v806 = vpop.f32.mrb[0].mxu0
        %v807 = vadd.f32 0.0, %v806
        %v808 = vpop.f32.mrb[0].mxu0
        %v809 = vpop.f32.mrb[0].mxu0
        %v810 = vadd.f32 0.0, %v809
        %v811 = vpop.f32.mrb[0].mxu0
        %812 = vmatprep.mubr.bf16.mxu0 0
        %813 = vmatmul.mubr.bf16.gmra.mrb[0].mxu0 %v690
        %v814 = vpop.f32.mrb[0].mxu0
        %v815 = vadd.f32 0.0, %v814
        %v816 = vpop.f32.mrb[0].mxu0
        %v817 = vpop.f32.mrb[0].mxu0
        %v818 = vadd.f32 0.0, %v817
        %v819 = vpop.f32.mrb[0].mxu0
        %820 = vdwg.mxu0
        %v821 = vadd.f32 %v657, %v791
        %v822 = vadd.f32 %v660, %v794
        %v823 = vadd.f32 %v665, %v799
        %v824 = vadd.f32 %v668, %v802
        %v825 = vadd.f32 %v673, %v807
        %v826 = vadd.f32 %v676, %v810
        %v827 = vadd.f32 %v681, %v815
        %v828 = vadd.f32 %v684, %v818
        %v829 = vld [vmem:[%s3] sm:$0x1]
        %v831 = vlaneseq
        %v832 = vshrl.u32 %v831, 7
        %v833 = vsub.s32 0, %v832
        %v834 = vrot.slane %v829, %v833
        %v836 = vmul.f32 %v821, %v834
        %v837 = vmul.f32 %v822, %v834
        %v838 = vmul.f32 %v823, %v834
        %v839 = vmul.f32 %v824, %v834
        %v840 = vmul.f32 %v825, %v834
        %v841 = vmul.f32 %v826, %v834
        %v842 = vmul.f32 %v827, %v834
        %v843 = vmul.f32 %v828, %v834
        %v844 = vld [vmem:[%s4] sm:$0x1]
        %v846 = vlaneseq
        %v847 = vshrl.u32 %v846, 7
        %v848 = vsub.s32 0, %v847
        %v849 = vrot.slane %v844, %v848
        %v851 = vadd.f32 %v836, %v849
        %v852 = vadd.f32 %v837, %v849
        %v853 = vadd.f32 %v838, %v849
        %v854 = vadd.f32 %v839, %v849
        %v855 = vadd.f32 %v840, %v849
        %v856 = vadd.f32 %v841, %v849
        %v857 = vadd.f32 %v842, %v849
        %v858 = vadd.f32 %v843, %v849
        %v859 = vmax.f32 %v851, 0.0
        %v860 = vmax.f32 %v852, 0.0
        %v861 = vmax.f32 %v853, 0.0
        %v862 = vmax.f32 %v854, 0.0
        %v863 = vmax.f32 %v855, 0.0
        %v864 = vmax.f32 %v856, 0.0
        %v865 = vmax.f32 %v857, 0.0
        %v866 = vmax.f32 %v858, 0.0
        %v867 = vrot.slane %v859, 7
        %v868 = vrot.slane %v860, 7
        %v869 = vrot.slane %v861, 7
        %v870 = vrot.slane %v862, 7
        %v871 = vrot.slane %v863, 7
        %v872 = vrot.slane %v864, 7
        %v873 = vrot.slane %v865, 7
        %v874 = vrot.slane %v866, 7
        %v875 = vsel %vm378, %v873, %v874
        %v876 = vsel %vm378, %v872, %v873
        %v877 = vsel %vm378, %v871, %v872
        %v878 = vsel %vm378, %v870, %v871
        %v879 = vsel %vm378, %v869, %v870
        %v880 = vsel %vm378, %v868, %v869
        %v881 = vsel %vm378, %v867, %v868
        %v882 = vsel %vm378, %v874, %v867
        %v883 = vsel %vm354, %v882, 0.0
        %v884 = vsel %vm355, %v881, 0.0
        %v885 = vsel %vm356, %v880, 0.0
        %v886 = vsel %vm357, %v879, 0.0
        %v887 = vsel %vm358, %v878, 0.0
        %v888 = vsel %vm359, %v877, 0.0
        %v889 = vsel %vm360, %v876, 0.0
        %v890 = vsel %vm361, %v875, 0.0
        %v891 = vrot.slane %v859, 1
        %v892 = vrot.slane %v860, 1
        %v893 = vrot.slane %v861, 1
        %v894 = vrot.slane %v862, 1
        %v895 = vrot.slane %v863, 1
        %v896 = vrot.slane %v864, 1
        %v897 = vrot.slane %v865, 1
        %v898 = vrot.slane %v866, 1
        %v899 = vsel %vm403, %v897, %v898
        %v900 = vsel %vm403, %v896, %v897
        %v901 = vsel %vm403, %v895, %v896
        %v902 = vsel %vm403, %v894, %v895
        %v903 = vsel %vm403, %v893, %v894
        %v904 = vsel %vm403, %v892, %v893
        %v905 = vsel %vm403, %v891, %v892
        %v906 = vsel %vm403, %v898, %v891
        %v907 = vsel %vm362, %v905, 0.0
        %v908 = vsel %vm363, %v904, 0.0
        %v909 = vsel %vm364, %v903, 0.0
        %v910 = vsel %vm365, %v902, 0.0
        %v911 = vsel %vm366, %v901, 0.0
        %v912 = vsel %vm367, %v900, 0.0
        %v913 = vsel %vm368, %v899, 0.0
        %v914 = vsel %vm369, %v906, 0.0
        %v915 = vpack.c.bf16 %v884, %v883
        %v916 = vpack.c.bf16 %v886, %v885
        %v917 = vpack.c.bf16 %v888, %v887
        %v918 = vpack.c.bf16 %v890, %v889
        %v919 = vld [vmem:[#allocation7] sm:$0xf]
        %v920 = vld [vmem:[#allocation7 + $0x4] sm:$0xf]
        %v921 = vld [vmem:[#allocation7 + $0x8] sm:$0xf]
        %v922 = vld [vmem:[#allocation7 + $0xc] sm:$0xf]
        %v923 = vld [vmem:[#allocation7 + $0x10] sm:$0xf]
        %v924 = vld [vmem:[#allocation7 + $0x14] sm:$0xf]
        %v925 = vld [vmem:[#allocation7 + $0x18] sm:$0xf]
        %v926 = vld [vmem:[#allocation7 + $0x1c] sm:$0xf]
        %v927 = vld [vmem:[#allocation7 + $0x20] sm:$0xf]
        %v928 = vld [vmem:[#allocation7 + $0x24] sm:$0xf]
        %v929 = vld [vmem:[#allocation7 + $0x28] sm:$0xf]
        %v930 = vld [vmem:[#allocation7 + $0x2c] sm:$0xf]
        %v931 = vld [vmem:[#allocation7 + $0x30] sm:$0xf]
        %v932 = vld [vmem:[#allocation7 + $0x34] sm:$0xf]
        %v933 = vld [vmem:[#allocation7 + $0x38] sm:$0xf]
        %v934 = vld [vmem:[#allocation7 + $0x3c] sm:$0xf]
        %v935 = vpack.c.bf16 %v860, %v859
        %v936 = vpack.c.bf16 %v862, %v861
        %v937 = vpack.c.bf16 %v864, %v863
        %v938 = vpack.c.bf16 %v866, %v865
        %s939 = scalar_lea.vmem [#allocation7], 64
        %v940 = vld [vmem:[%s939] sm:$0xf]
        %v941 = vld [vmem:[%s939 + $0x4] sm:$0xf]
        %v942 = vld [vmem:[%s939 + $0x8] sm:$0xf]
        %v943 = vld [vmem:[%s939 + $0xc] sm:$0xf]
        %v944 = vld [vmem:[%s939 + $0x10] sm:$0xf]
        %v945 = vld [vmem:[%s939 + $0x14] sm:$0xf]
        %v946 = vld [vmem:[%s939 + $0x18] sm:$0xf]
        %v947 = vld [vmem:[%s939 + $0x1c] sm:$0xf]
        %v948 = vld [vmem:[%s939 + $0x20] sm:$0xf]
        %v949 = vld [vmem:[%s939 + $0x24] sm:$0xf]
        %v950 = vld [vmem:[%s939 + $0x28] sm:$0xf]
        %v951 = vld [vmem:[%s939 + $0x2c] sm:$0xf]
        %v952 = vld [vmem:[%s939 + $0x30] sm:$0xf]
        %v953 = vld [vmem:[%s939 + $0x34] sm:$0xf]
        %v954 = vld [vmem:[%s939 + $0x38] sm:$0xf]
        %v955 = vld [vmem:[%s939 + $0x3c] sm:$0xf]
        %v972 = vunpack.c.l.b16 %v940
        %v973 = vunpack.c.l.b16 %v941
        %v974 = vunpack.c.l.b16 %v942
        %v975 = vunpack.c.l.b16 %v943
        %v976 = vunpack.c.l.b16 %v944
        %v977 = vunpack.c.l.b16 %v945
        %v978 = vunpack.c.l.b16 %v946
        %v979 = vunpack.c.l.b16 %v947
        %v980 = vunpack.c.l.b16 %v948
        %v981 = vunpack.c.l.b16 %v949
        %v982 = vunpack.c.l.b16 %v950
        %v983 = vunpack.c.l.b16 %v951
        %v984 = vunpack.c.l.b16 %v952
        %v985 = vunpack.c.l.b16 %v953
        %v986 = vunpack.c.l.b16 %v954
        %v987 = vunpack.c.l.b16 %v955
        %v988 = vpack.c.b16 %v973, %v972
        %v989 = vpack.c.b16 %v975, %v974
        %v990 = vpack.c.b16 %v977, %v976
        %v991 = vpack.c.b16 %v979, %v978
        %v992 = vpack.c.b16 %v981, %v980
        %v993 = vpack.c.b16 %v983, %v982
        %v994 = vpack.c.b16 %v985, %v984
        %v995 = vpack.c.b16 %v987, %v986
        %1004 = vmatprep.subr.bf16.mxu0 0
        %1005 = vmatpush1.bf16.msra.mxu0 %v988
        %1006 = vmatprep.subr.bf16.mxu0 0
        %1007 = vmatpush1.bf16.msra.mxu0 %v989
        %1008 = vmatprep.subr.bf16.mxu0 0
        %1009 = vmatpush1.bf16.msra.mxu0 %v990
        %1010 = vmatprep.subr.bf16.mxu0 0
        %1011 = vmatpush1.bf16.msra.mxu0 %v991
        %1012 = vmatprep.subr.bf16.mxu0 0
        %1013 = vmatpush1.bf16.msra.mxu0 %v992
        %1014 = vmatprep.subr.bf16.mxu0 0
        %1015 = vmatpush1.bf16.msra.mxu0 %v993
        %1016 = vmatprep.subr.bf16.mxu0 0
        %1017 = vmatpush1.bf16.msra.mxu0 %v994
        %1018 = vmatprep.subr.bf16.mxu0 0
        %1019 = vmatpush1.bf16.msra.mxu0 %v995
        %1020 = vmatprep.subr.bf16.mxu0 0
        %1021 = vmatpush1.bf16.msra.mxu0 0
        %1022 = vmatprep.subr.bf16.mxu0 0
        %1023 = vmatpush1.bf16.msra.mxu0 0
        %1024 = vmatprep.subr.bf16.mxu0 0
        %1025 = vmatpush1.bf16.msra.mxu0 0
        %1026 = vmatprep.subr.bf16.mxu0 0
        %1027 = vmatpush1.bf16.msra.mxu0 0
        %1028 = vmatprep.subr.bf16.mxu0 0
        %1029 = vmatpush1.bf16.msra.mxu0 0
        %1030 = vmatprep.subr.bf16.mxu0 0
        %1031 = vmatpush1.bf16.msra.mxu0 0
        %1032 = vmatprep.subr.bf16.mxu0 0
        %1033 = vmatpush1.bf16.msra.mxu0 0
        %1034 = vmatprep.subr.bf16.mxu0 0
        %1035 = vmatpush1.bf16.msra.mxu0 0
        %1036 = vmatprep.mubr.bf16.mxu0 0
        %1037 = vmatmul.mubr.bf16.gmra.mrb[0].mxu0 %v935
        %v1038 = vpop.f32.mrb[0].mxu0
        %v1039 = vadd.f32 0.0, %v1038
        %v1040 = vpop.f32.mrb[0].mxu0
        %v1041 = vpop.f32.mrb[0].mxu0
        %v1042 = vadd.f32 0.0, %v1041
        %v1043 = vpop.f32.mrb[0].mxu0
        %1044 = vmatprep.mubr.bf16.mxu0 0
        %1045 = vmatmul.mubr.bf16.gmra.mrb[0].mxu0 %v936
        %v1046 = vpop.f32.mrb[0].mxu0
        %v1047 = vadd.f32 0.0, %v1046
        %v1048 = vpop.f32.mrb[0].mxu0
        %v1049 = vpop.f32.mrb[0].mxu0
        %v1050 = vadd.f32 0.0, %v1049
        %v1051 = vpop.f32.mrb[0].mxu0
        %1052 = vmatprep.mubr.bf16.mxu0 0
        %1053 = vmatmul.mubr.bf16.gmra.mrb[0].mxu0 %v937
        %v1054 = vpop.f32.mrb[0].mxu0
        %v1055 = vadd.f32 0.0, %v1054
        %v1056 = vpop.f32.mrb[0].mxu0
        %v1057 = vpop.f32.mrb[0].mxu0
        %v1058 = vadd.f32 0.0, %v1057
        %v1059 = vpop.f32.mrb[0].mxu0
        %1060 = vmatprep.mubr.bf16.mxu0 0
        %1061 = vmatmul.mubr.bf16.gmra.mrb[0].mxu0 %v938
        %v1062 = vpop.f32.mrb[0].mxu0
        %v1063 = vadd.f32 0.0, %v1062
        %v1064 = vpop.f32.mrb[0].mxu0
        %v1065 = vpop.f32.mrb[0].mxu0
        %v1066 = vadd.f32 0.0, %v1065
        %v1067 = vpop.f32.mrb[0].mxu0
        %1068 = vdwg.mxu0
        %v1085 = vunpack.c.l.b16 %v919
        %v1086 = vunpack.c.l.b16 %v920
        %v1087 = vunpack.c.l.b16 %v921
        %v1088 = vunpack.c.l.b16 %v922
        %v1089 = vunpack.c.l.b16 %v923
        %v1090 = vunpack.c.l.b16 %v924
        %v1091 = vunpack.c.l.b16 %v925
        %v1092 = vunpack.c.l.b16 %v926
        %v1093 = vunpack.c.l.b16 %v927
        %v1094 = vunpack.c.l.b16 %v928
        %v1095 = vunpack.c.l.b16 %v929
        %v1096 = vunpack.c.l.b16 %v930
        %v1097 = vunpack.c.l.b16 %v931
        %v1098 = vunpack.c.l.b16 %v932
        %v1099 = vunpack.c.l.b16 %v933
        %v1100 = vunpack.c.l.b16 %v934
        %v1101 = vpack.c.b16 %v1086, %v1085
        %v1102 = vpack.c.b16 %v1088, %v1087
        %v1103 = vpack.c.b16 %v1090, %v1089
        %v1104 = vpack.c.b16 %v1092, %v1091
        %v1105 = vpack.c.b16 %v1094, %v1093
        %v1106 = vpack.c.b16 %v1096, %v1095
        %v1107 = vpack.c.b16 %v1098, %v1097
        %v1108 = vpack.c.b16 %v1100, %v1099
        %1117 = vmatprep.subr.bf16.mxu0 0
        %1118 = vmatpush1.bf16.msra.mxu0 %v1101
        %1119 = vmatprep.subr.bf16.mxu0 0
        %1120 = vmatpush1.bf16.msra.mxu0 %v1102
        %1121 = vmatprep.subr.bf16.mxu0 0
        %1122 = vmatpush1.bf16.msra.mxu0 %v1103
        %1123 = vmatprep.subr.bf16.mxu0 0
        %1124 = vmatpush1.bf16.msra.mxu0 %v1104
        %1125 = vmatprep.subr.bf16.mxu0 0
        %1126 = vmatpush1.bf16.msra.mxu0 %v1105
        %1127 = vmatprep.subr.bf16.mxu0 0
        %1128 = vmatpush1.bf16.msra.mxu0 %v1106
        %1129 = vmatprep.subr.bf16.mxu0 0
        %1130 = vmatpush1.bf16.msra.mxu0 %v1107
        %1131 = vmatprep.subr.bf16.mxu0 0
        %1132 = vmatpush1.bf16.msra.mxu0 %v1108
        %1133 = vmatprep.subr.bf16.mxu0 0
        %1134 = vmatpush1.bf16.msra.mxu0 0
        %1135 = vmatprep.subr.bf16.mxu0 0
        %1136 = vmatpush1.bf16.msra.mxu0 0
        %1137 = vmatprep.subr.bf16.mxu0 0
        %1138 = vmatpush1.bf16.msra.mxu0 0
        %1139 = vmatprep.subr.bf16.mxu0 0
        %1140 = vmatpush1.bf16.msra.mxu0 0
        %1141 = vmatprep.subr.bf16.mxu0 0
        %1142 = vmatpush1.bf16.msra.mxu0 0
        %1143 = vmatprep.subr.bf16.mxu0 0
        %1144 = vmatpush1.bf16.msra.mxu0 0
        %1145 = vmatprep.subr.bf16.mxu0 0
        %1146 = vmatpush1.bf16.msra.mxu0 0
        %1147 = vmatprep.subr.bf16.mxu0 0
        %1148 = vmatpush1.bf16.msra.mxu0 0
        %1149 = vmatprep.mubr.bf16.mxu0 0
        %1150 = vmatmul.mubr.bf16.gmra.mrb[0].mxu0 %v915
        %v1151 = vpop.f32.mrb[0].mxu0
        %v1152 = vadd.f32 %v1039, %v1151
        %v1153 = vpop.f32.mrb[0].mxu0
        %v1154 = vpop.f32.mrb[0].mxu0
        %v1155 = vadd.f32 %v1042, %v1154
        %v1156 = vpop.f32.mrb[0].mxu0
        %1157 = vmatprep.mubr.bf16.mxu0 0
        %1158 = vmatmul.mubr.bf16.gmra.mrb[0].mxu0 %v916
        %v1159 = vpop.f32.mrb[0].mxu0
        %v1160 = vadd.f32 %v1047, %v1159
        %v1161 = vpop.f32.mrb[0].mxu0
        %v1162 = vpop.f32.mrb[0].mxu0
        %v1163 = vadd.f32 %v1050, %v1162
        %v1164 = vpop.f32.mrb[0].mxu0
        %1165 = vmatprep.mubr.bf16.mxu0 0
        %1166 = vmatmul.mubr.bf16.gmra.mrb[0].mxu0 %v917
        %v1167 = vpop.f32.mrb[0].mxu0
        %v1168 = vadd.f32 %v1055, %v1167
        %v1169 = vpop.f32.mrb[0].mxu0
        %v1170 = vpop.f32.mrb[0].mxu0
        %v1171 = vadd.f32 %v1058, %v1170
        %v1172 = vpop.f32.mrb[0].mxu0
        %1173 = vmatprep.mubr.bf16.mxu0 0
        %1174 = vmatmul.mubr.bf16.gmra.mrb[0].mxu0 %v918
        %v1175 = vpop.f32.mrb[0].mxu0
        %v1176 = vadd.f32 %v1063, %v1175
        %v1177 = vpop.f32.mrb[0].mxu0
        %v1178 = vpop.f32.mrb[0].mxu0
        %v1179 = vadd.f32 %v1066, %v1178
        %v1180 = vpop.f32.mrb[0].mxu0
        %1181 = vdwg.mxu0
        %v1182 = vpack.c.bf16 %v908, %v907
        %v1183 = vpack.c.bf16 %v910, %v909
        %v1184 = vpack.c.bf16 %v912, %v911
        %v1185 = vpack.c.bf16 %v914, %v913
        %s1186 = scalar_lea.vmem [#allocation7], 128
        %v1187 = vld [vmem:[%s1186] sm:$0xf]
        %v1188 = vld [vmem:[%s1186 + $0x4] sm:$0xf]
        %v1189 = vld [vmem:[%s1186 + $0x8] sm:$0xf]
        %v1190 = vld [vmem:[%s1186 + $0xc] sm:$0xf]
        %v1191 = vld [vmem:[%s1186 + $0x10] sm:$0xf]
        %v1192 = vld [vmem:[%s1186 + $0x14] sm:$0xf]
        %v1193 = vld [vmem:[%s1186 + $0x18] sm:$0xf]
        %v1194 = vld [vmem:[%s1186 + $0x1c] sm:$0xf]
        %v1195 = vld [vmem:[%s1186 + $0x20] sm:$0xf]
        %v1196 = vld [vmem:[%s1186 + $0x24] sm:$0xf]
        %v1197 = vld [vmem:[%s1186 + $0x28] sm:$0xf]
        %v1198 = vld [vmem:[%s1186 + $0x2c] sm:$0xf]
        %v1199 = vld [vmem:[%s1186 + $0x30] sm:$0xf]
        %v1200 = vld [vmem:[%s1186 + $0x34] sm:$0xf]
        %v1201 = vld [vmem:[%s1186 + $0x38] sm:$0xf]
        %v1202 = vld [vmem:[%s1186 + $0x3c] sm:$0xf]
        %v1219 = vunpack.c.l.b16 %v1187
        %v1220 = vunpack.c.l.b16 %v1188
        %v1221 = vunpack.c.l.b16 %v1189
        %v1222 = vunpack.c.l.b16 %v1190
        %v1223 = vunpack.c.l.b16 %v1191
        %v1224 = vunpack.c.l.b16 %v1192
        %v1225 = vunpack.c.l.b16 %v1193
        %v1226 = vunpack.c.l.b16 %v1194
        %v1227 = vunpack.c.l.b16 %v1195
        %v1228 = vunpack.c.l.b16 %v1196
        %v1229 = vunpack.c.l.b16 %v1197
        %v1230 = vunpack.c.l.b16 %v1198
        %v1231 = vunpack.c.l.b16 %v1199
        %v1232 = vunpack.c.l.b16 %v1200
        %v1233 = vunpack.c.l.b16 %v1201
        %v1234 = vunpack.c.l.b16 %v1202
        %v1235 = vpack.c.b16 %v1220, %v1219
        %v1236 = vpack.c.b16 %v1222, %v1221
        %v1237 = vpack.c.b16 %v1224, %v1223
        %v1238 = vpack.c.b16 %v1226, %v1225
        %v1239 = vpack.c.b16 %v1228, %v1227
        %v1240 = vpack.c.b16 %v1230, %v1229
        %v1241 = vpack.c.b16 %v1232, %v1231
        %v1242 = vpack.c.b16 %v1234, %v1233
        %1251 = vmatprep.subr.bf16.mxu0 0
        %1252 = vmatpush1.bf16.msra.mxu0 %v1235
        %1253 = vmatprep.subr.bf16.mxu0 0
        %1254 = vmatpush1.bf16.msra.mxu0 %v1236
        %1255 = vmatprep.subr.bf16.mxu0 0
        %1256 = vmatpush1.bf16.msra.mxu0 %v1237
        %1257 = vmatprep.subr.bf16.mxu0 0
        %1258 = vmatpush1.bf16.msra.mxu0 %v1238
        %1259 = vmatprep.subr.bf16.mxu0 0
        %1260 = vmatpush1.bf16.msra.mxu0 %v1239
        %1261 = vmatprep.subr.bf16.mxu0 0
        %1262 = vmatpush1.bf16.msra.mxu0 %v1240
        %1263 = vmatprep.subr.bf16.mxu0 0
        %1264 = vmatpush1.bf16.msra.mxu0 %v1241
        %1265 = vmatprep.subr.bf16.mxu0 0
        %1266 = vmatpush1.bf16.msra.mxu0 %v1242
        %1267 = vmatprep.subr.bf16.mxu0 0
        %1268 = vmatpush1.bf16.msra.mxu0 0
        %1269 = vmatprep.subr.bf16.mxu0 0
        %1270 = vmatpush1.bf16.msra.mxu0 0
        %1271 = vmatprep.subr.bf16.mxu0 0
        %1272 = vmatpush1.bf16.msra.mxu0 0
        %1273 = vmatprep.subr.bf16.mxu0 0
        %1274 = vmatpush1.bf16.msra.mxu0 0
        %1275 = vmatprep.subr.bf16.mxu0 0
        %1276 = vmatpush1.bf16.msra.mxu0 0
        %1277 = vmatprep.subr.bf16.mxu0 0
        %1278 = vmatpush1.bf16.msra.mxu0 0
        %1279 = vmatprep.subr.bf16.mxu0 0
        %1280 = vmatpush1.bf16.msra.mxu0 0
        %1281 = vmatprep.subr.bf16.mxu0 0
        %1282 = vmatpush1.bf16.msra.mxu0 0
        %1283 = vmatprep.mubr.bf16.mxu0 0
        %1284 = vmatmul.mubr.bf16.gmra.mrb[0].mxu0 %v1182
        %v1285 = vpop.f32.mrb[0].mxu0
        %v1286 = vadd.f32 0.0, %v1285
        %v1287 = vpop.f32.mrb[0].mxu0
        %v1288 = vpop.f32.mrb[0].mxu0
        %v1289 = vadd.f32 0.0, %v1288
        %v1290 = vpop.f32.mrb[0].mxu0
        %1291 = vmatprep.mubr.bf16.mxu0 0
        %1292 = vmatmul.mubr.bf16.gmra.mrb[0].mxu0 %v1183
        %v1293 = vpop.f32.mrb[0].mxu0
        %v1294 = vadd.f32 0.0, %v1293
        %v1295 = vpop.f32.mrb[0].mxu0
        %v1296 = vpop.f32.mrb[0].mxu0
        %v1297 = vadd.f32 0.0, %v1296
        %v1298 = vpop.f32.mrb[0].mxu0
        %1299 = vmatprep.mubr.bf16.mxu0 0
        %1300 = vmatmul.mubr.bf16.gmra.mrb[0].mxu0 %v1184
        %v1301 = vpop.f32.mrb[0].mxu0
        %v1302 = vadd.f32 0.0, %v1301
        %v1303 = vpop.f32.mrb[0].mxu0
        %v1304 = vpop.f32.mrb[0].mxu0
        %v1305 = vadd.f32 0.0, %v1304
        %v1306 = vpop.f32.mrb[0].mxu0
        %1307 = vmatprep.mubr.bf16.mxu0 0
        %1308 = vmatmul.mubr.bf16.gmra.mrb[0].mxu0 %v1185
        %v1309 = vpop.f32.mrb[0].mxu0
        %v1310 = vadd.f32 0.0, %v1309
        %v1311 = vpop.f32.mrb[0].mxu0
        %v1312 = vpop.f32.mrb[0].mxu0
        %v1313 = vadd.f32 0.0, %v1312
        %v1314 = vpop.f32.mrb[0].mxu0
        %1315 = vdwg.mxu0
        %v1316 = vadd.f32 %v1152, %v1286
        %v1317 = vadd.f32 %v1155, %v1289
        %v1318 = vadd.f32 %v1160, %v1294
        %v1319 = vadd.f32 %v1163, %v1297
        %v1320 = vadd.f32 %v1168, %v1302
        %v1321 = vadd.f32 %v1171, %v1305
        %v1322 = vadd.f32 %v1176, %v1310
        %v1323 = vadd.f32 %v1179, %v1313
        %v1324 = vld [vmem:[%s5] sm:$0x1]
        %v1326 = vlaneseq
        %v1327 = vshrl.u32 %v1326, 7
        %v1328 = vsub.s32 0, %v1327
        %v1329 = vrot.slane %v1324, %v1328
        %v1331 = vmul.f32 %v1316, %v1329
        %v1332 = vmul.f32 %v1317, %v1329
        %v1333 = vmul.f32 %v1318, %v1329
        %v1334 = vmul.f32 %v1319, %v1329
        %v1335 = vmul.f32 %v1320, %v1329
        %v1336 = vmul.f32 %v1321, %v1329
        %v1337 = vmul.f32 %v1322, %v1329
        %v1338 = vmul.f32 %v1323, %v1329
        %v1339 = vld [vmem:[%s6] sm:$0x1]
        %v1341 = vlaneseq
        %v1342 = vshrl.u32 %v1341, 7
        %v1343 = vsub.s32 0, %v1342
        %v1344 = vrot.slane %v1339, %v1343
        %v1346 = vadd.f32 %v1331, %v1344
        %v1347 = vadd.f32 %v1332, %v1344
        %v1348 = vadd.f32 %v1333, %v1344
        %v1349 = vadd.f32 %v1334, %v1344
        %v1350 = vadd.f32 %v1335, %v1344
        %v1351 = vadd.f32 %v1336, %v1344
        %v1352 = vadd.f32 %v1337, %v1344
        %v1353 = vadd.f32 %v1338, %v1344
        %v1354 = vadd.f32 %v1346, %v329
        %v1355 = vadd.f32 %v1347, %v330
        %v1356 = vadd.f32 %v1348, %v331
        %v1357 = vadd.f32 %v1349, %v332
        %v1358 = vadd.f32 %v1350, %v333
        %v1359 = vadd.f32 %v1351, %v334
        %v1360 = vadd.f32 %v1352, %v335
        %v1361 = vadd.f32 %v1353, %v336
        %v1362 = vmax.f32 %v1354, 0.0
        %v1363 = vmax.f32 %v1355, 0.0
        %v1364 = vmax.f32 %v1356, 0.0
        %v1365 = vmax.f32 %v1357, 0.0
        %v1366 = vmax.f32 %v1358, 0.0
        %v1367 = vmax.f32 %v1359, 0.0
        %v1368 = vmax.f32 %v1360, 0.0
        %v1369 = vmax.f32 %v1361, 0.0
        %1370 = vst [vmem:[%s325] sm:$0xff] %v1362
        %1371 = vst [vmem:[%s325 + $0x8] sm:$0xff] %v1363
        %1372 = vst [vmem:[%s325 + $0x10] sm:$0xff] %v1364
        %1373 = vst [vmem:[%s325 + $0x18] sm:$0xff] %v1365
        %1374 = vst [vmem:[%s325 + $0x20] sm:$0xff] %v1366
        %1375 = vst [vmem:[%s325 + $0x28] sm:$0xff] %v1367
        %1376 = vst [vmem:[%s325 + $0x30] sm:$0xff] %v1368
        %1377 = vst [vmem:[%s325 + $0x38] sm:$0xff] %v1369
        %s1378 = sand.u32 %s185, 1
        %s1379 = scalar_lea.sflag [#allocation4], %s1378
        %s1380 = sand.u32 %s185, 1
        %s1381 = smul.addr %s1380, 64
        %s1382 = scalar_lea.vmem [#allocation8], %s1381
        // Predicated region
        $region61: #{tpu_custom_call.1} parent=47 // pred_check
          %p1383 = pneg %p195
        $region62: #{tpu_custom_call.1} parent=47 // pred_check_branch
          %1385 = sbr.rel (%p1383) target = $region64
        $region63: #{tpu_custom_call.1} parent=47 // pred_region
          %s1386 = smul.u32 8, %s25
          %s1388 = ssub.s32 1024, 1024
          %1389 = vsyncadd %s1379, %s1388
          %s1390 = smul.addr %s1386, 128
          %s1391 = scalar_lea.hbm %s7, %s1390
          %s1392 = sshll.u32 %s1382, 4
          %s1393 = int_to_ptr.vmem [resolvable:$true] %s1392
          %1398 = dma.vmem_to_hbm [thread:$0]  %s1393, 1024, %s1391, %s1379, 128, 128, 8
        $region64: #{tpu_custom_call.1} parent=47 // pred_fallthru
          _
      $region48: #{tpu_custom_call.1} parent=5 // pred_fallthru
        _
      %p1399 = scmp.le.s32.totalorder 2, %s20
      // Predicated region
      $region65: #{tpu_custom_call.1} parent=5 // pred_check
        %p1400 = pneg %p1399
      $region66: #{tpu_custom_call.1} parent=5 // pred_check_branch
        %1402 = sbr.rel (%p1400) target = $region68
      $region67: #{tpu_custom_call.1} parent=5 // pred_region
        %s1403 = ssub.s32 %s20, 2
        // Predicated region
        $region69: #{tpu_custom_call.1} parent=67 // pred_check
          %p1404 = pneg %p201
        $region70: #{tpu_custom_call.1} parent=67 // pred_check_branch
          %1406 = sbr.rel (%p1404) target = $region72
        $region71: #{tpu_custom_call.1} parent=67 // pred_region
          %s1407 = sand.u32 %s186, 1
          %s1408 = scalar_lea.sflag [#allocation4], %s1407
          %s1409 = sand.u32 %s186, 1
          %s1410 = smul.addr %s1409, 64
          %s1411 = scalar_lea.vmem [#allocation8], %s1410
          %1412 = dma.done %s1408, 1024
        $region72: #{tpu_custom_call.1} parent=67 // pred_fallthru
          _
      $region68: #{tpu_custom_call.1} parent=5 // pred_fallthru
        _
    $region6: #{tpu_custom_call.1} parent=1 // loop_footer
      %s24 = sadd.s32 1, %s20
    $region7: #{tpu_custom_call.1} parent=1 // loop_footer_branch
      %19 = sbr.rel target = $region3
    $region8: #{tpu_custom_call.1} parent=1 // loop_exit
      _
    %1413 = vsyncpa [#allocation3], 1
    %s1414 = scalar_lea.sflag [#allocation3], 1
    %1415 = vsyncpa %s1414, 1
    %1416 = vsyncpa [#allocation6], 1
    %1417 = vsyncpa [#allocation4], 1
    %s1418 = scalar_lea.sflag [#allocation4], 1
    %1419 = vsyncpa %s1418, 1

</llo_original>
